<compile_context>
chip_gen: v7x
topology: tpu7x:2x2x1
jax: 0.10.0
libtpu: 0.0.40
codegen_flags: <defaults>
</compile_context>

<pallas_src>
import numpy as np
import jax
import jax.numpy as jnp
from jax.experimental import pallas as pl
from jax.experimental.pallas import tpu as pltpu

# Lif2d soma constants (soma_params='all_share', mode='spike', hard reset).
# Deterministic synthetic values — this is a synthetic kernel, not a checkpoint.
ALPHA = 0.3   # membrane decay
THETA = 0.5   # firing threshold
V0 = 0.0      # reset potential


def _make_block_kernel(H, W, C, P, TT):
    WC = W * C            # lane width of the input / identity
    WP = W * P            # lane width of the conv outputs / spikes
    SH = H                # rows per time step inside a block (one batch elem)
    R = TT * SH           # rows per grid block
    assert WC == WP, "stride=1 / downsample=None instance requires C == P"

    def kernel(x_ref, m1_ref, b1_ref, m2_ref, b2_ref, o_ref,
               v1_ref, v2_ref, a_scr):
        # Membrane potentials persist across time blocks of one batch element;
        # reset when a new batch element starts (the time axis is the inner,
        # sequential "arbitrary" grid axis).
        @pl.when(pl.program_id(1) == 0)
        def _():
            v1_ref[...] = jnp.zeros_like(v1_ref)
            v2_ref[...] = jnp.zeros_like(v2_ref)

        # Row-within-frame index (hoisted once per block): zeroes the halo rows
        # after the sublane roll => 'same' zero padding along H and no leakage
        # across the H-row frame boundaries (rows are ordered (t, y)).
        yy = jax.lax.broadcasted_iota(jnp.int32, (R, WC), 0) % H
        top = yy == 0
        bot = yy == H - 1

        def conv(a, m_ref, b_ref):
            # a:     (R, K) f32 lane-dense activations (K == WC == WP)
            # m_ref: (3*K, WP) bf16 banded weights, dy taps stacked along K
            # b_ref: (1, WP) f32 folded BN bias
            a_up = jnp.where(top, 0.0, pltpu.roll(a, 1, 0))               # in[y-1]
            a_dn = jnp.where(bot, 0.0, pltpu.roll(a, a.shape[0] - 1, 0))  # in[y+1]
            # One K=384 MXU matmul instead of three K=128 dots + two adds.
            lhs = jnp.concatenate([a_up, a, a_dn], axis=-1).astype(jnp.bfloat16)
            acc = jnp.dot(lhs, m_ref[...], preferred_element_type=jnp.float32)
            return acc + b_ref[...]

        # ---- conv1 + BN for every time step of this block (no recurrence) ----
        a_scr[...] = conv(x_ref[...], m1_ref, b1_ref)           # (R, WP) f32

        # ---- Lif2d #1: elementwise recurrence over time, spikes in place ----
        for t in range(TT):
            rows = pl.ds(t * SH, SH)
            v1 = ALPHA * v1_ref[...] + a_scr[rows, :]
            s1 = v1 >= THETA
            v1_ref[...] = jnp.where(s1, V0, v1)                  # hard reset
            a_scr[rows, :] = s1.astype(jnp.float32)              # spikes {0,1}

        # ---- conv2 + BN, batched over all TT steps (spikes exact in bf16) ----
        a_scr[...] = conv(a_scr[...], m2_ref, b2_ref)

        # ---- residual add (identity, downsample=None) + Lif2d #2 ----
        for t in range(TT):
            rows = pl.ds(t * SH, SH)
            pre = a_scr[rows, :] + x_ref[rows, :]
            v2 = ALPHA * v2_ref[...] + pre
            s2 = v2 >= THETA
            v2_ref[...] = jnp.where(s2, V0, v2)
            o_ref[rows, :] = s2.astype(o_ref.dtype)

    return kernel


def _band_weights(w, scale, W):
    """Fold dx taps + channel contraction (+ BN scale) into a stacked banded matrix.

    w: (3, 3, C, P) HWIO conv weights; scale: (P,) folded BN scale.
    Returns (3*W*C, W*P): the dy=0/1/2 bands are stacked along the rows so one
    matmul against concat([in[y-1], in[y], in[y+1]], lanes) implements the 3x3
    'same' conv along W (H is handled by rolls + masks in the kernel).
    """
    _, _, C, P = w.shape
    ws = (w * scale).astype(jnp.float32)                  # (3, 3, C, P)
    band = np.zeros((3, W, W), np.float32)                # band[dx, xs, x]
    for dx in range(3):
        for x in range(W):
            xs = x + dx - 1
            if 0 <= xs < W:
                band[dx, xs, x] = 1.0
    # Exact 0/1 selection (HIGHEST precision) so the only rounding the weights
    # ever see is the final bf16 cast, mirrored exactly by the reference.
    m = jnp.einsum('dsx,ydcp->yscxp', jnp.asarray(band), ws,
                   precision=jax.lax.Precision.HIGHEST)   # (3, W, C, W, P)
    return m.reshape(3 * W * C, W * P)


def basic_block_pallas(x_tbchw, w1, sb1, w2, sb2, tt=None):
    """x_tbchw: (T, B, C, H, W) float32 -> (T, B, planes, H, W) float32 spikes."""
    T, B, C, H, W = x_tbchw.shape
    P = w1.shape[-1]
    assert C == P, "this kernel instance covers stride=1, downsample=None"
    if tt is None:
        tt = T                    # one time block per batch element
    assert T % tt == 0
    WC, WP = W * C, W * P
    R = tt * H
    nt = T // tt

    # Lane-dense, batch-major layout: (B, T, H, W*C); with W=16, C=8 the lane
    # axis is exactly 128 wide so every load/store is full-lane.
    x2d = jnp.transpose(x_tbchw, (1, 0, 3, 4, 2)).reshape(B * T * H, WC)

    # Banded weights (BN scale folded, dy taps stacked) as bf16 MXU operands;
    # per-channel BN bias tiled over W so it adds directly in lane layout (f32).
    m1 = _band_weights(w1, sb1[0], W).astype(jnp.bfloat16)    # (3*WC, WP)
    b1 = jnp.tile(sb1[1], (W,)).reshape(1, WP).astype(jnp.float32)
    m2 = _band_weights(w2, sb2[0], W).astype(jnp.bfloat16)    # (3*WP, WP)
    b2 = jnp.tile(sb2[1], (W,)).reshape(1, WP).astype(jnp.float32)

    kernel = _make_block_kernel(H, W, C, P, tt)
    out2d = pl.pallas_call(
        kernel,
        out_shape=jax.ShapeDtypeStruct((B * T * H, WP), jnp.float32),
        grid_spec=pltpu.PrefetchScalarGridSpec(
            num_scalar_prefetch=0,
            grid=(B, nt),          # (batch: parallel, time blocks: recurrent)
            in_specs=[
                pl.BlockSpec((R, WC), lambda b, i: (b * nt + i, 0)),
                pl.BlockSpec((3 * WC, WP), lambda b, i: (0, 0)),
                pl.BlockSpec((1, WP), lambda b, i: (0, 0)),
                pl.BlockSpec((3 * WP, WP), lambda b, i: (0, 0)),
                pl.BlockSpec((1, WP), lambda b, i: (0, 0)),
            ],
            out_specs=pl.BlockSpec((R, WP), lambda b, i: (b * nt + i, 0)),
            scratch_shapes=[
                pltpu.VMEM((H, WP), jnp.float32),    # LIF1 membrane potential
                pltpu.VMEM((H, WP), jnp.float32),    # LIF2 membrane potential
                pltpu.VMEM((R, WP), jnp.float32),    # o1 / spikes / o2 staging
            ],
        ),
        compiler_params=pltpu.CompilerParams(
            dimension_semantics=("parallel", "arbitrary")),
    )(x2d, m1, b1, m2, b2)

    out = out2d.reshape(B, T, H, W, P)
    return jnp.transpose(out, (1, 0, 4, 2, 3))       # back to (T, B, C, H, W)


def make_params(key, cin, planes):
    """Deterministic Conv+BN params, BN folded into per-channel (scale, bias)."""
    ks = jax.random.split(key, 12)

    def bn_fold(conv_b, gamma, beta, mean, var, eps=1e-5):
        scale = gamma / jnp.sqrt(var + eps)
        bias = (conv_b - mean) * scale + beta
        return jnp.stack([scale, bias]).astype(jnp.float32)   # (2, planes)

    w1 = 0.3 * jax.random.normal(ks[0], (3, 3, cin, planes), jnp.float32)
    sb1 = bn_fold(
        0.05 * jax.random.normal(ks[1], (planes,), jnp.float32),
        1.0 + 0.1 * jax.random.normal(ks[2], (planes,), jnp.float32),
        0.05 * jax.random.normal(ks[3], (planes,), jnp.float32),
        0.05 * jax.random.normal(ks[4], (planes,), jnp.float32),
        1.0 + 0.1 * jnp.abs(jax.random.normal(ks[5], (planes,), jnp.float32)),
    )
    w2 = 0.3 * jax.random.normal(ks[6], (3, 3, planes, planes), jnp.float32)
    sb2 = bn_fold(
        0.05 * jax.random.normal(ks[7], (planes,), jnp.float32),
        1.0 + 0.1 * jax.random.normal(ks[8], (planes,), jnp.float32),
        0.05 * jax.random.normal(ks[9], (planes,), jnp.float32),
        0.05 * jax.random.normal(ks[10], (planes,), jnp.float32),
        1.0 + 0.1 * jnp.abs(jax.random.normal(ks[11], (planes,), jnp.float32)),
    )
    return w1, sb1, w2, sb2


def ref_block(x_tbchw, w1, sb1, w2, sb2):
    """Pure-JAX reference with the kernel's numerical contract: conv operands
    (inputs and BN-scale-folded weights) rounded to bf16, while accumulation,
    BN bias, residual and all LIF / threshold math stay in f32."""
    x = jnp.transpose(x_tbchw, (0, 1, 3, 4, 2)).astype(jnp.float32)
    T, B, H, W, C = x.shape
    P = w1.shape[-1]

    def q(a):  # bf16 operand rounding (same rounding the MXU operands see)
        return a.astype(jnp.bfloat16).astype(jnp.float32)

    w1s = q(w1 * sb1[0])
    w2s = q(w2 * sb2[0])

    def conv(xf, w):
        return jax.lax.conv_general_dilated(
            xf, w, (1, 1), ((1, 1), (1, 1)),
            dimension_numbers=('NHWC', 'HWIO', 'NHWC'),
            precision=jax.lax.Precision.HIGHEST)

    def step(carry, xt):
        v1, v2 = carry
        o1 = conv(q(xt), w1s) + sb1[1]
        v1 = ALPHA * v1 + o1
        s1 = (v1 >= THETA).astype(jnp.float32)
        v1 = v1 * (1.0 - s1) + V0 * s1
        o2 = conv(s1, w2s) + sb2[1]        # spikes {0,1} are exact in bf16
        pre = o2 + xt                      # identity path stays full f32
        v2 = ALPHA * v2 + pre
        s2 = (v2 >= THETA).astype(jnp.float32)
        v2 = v2 * (1.0 - s2) + V0 * s2
        return (v1, v2), s2

    init = (jnp.zeros((B, H, W, P), jnp.float32),
            jnp.zeros((B, H, W, P), jnp.float32))
    _, ys = jax.lax.scan(step, init, x)
    return jnp.transpose(ys, (0, 1, 4, 2, 3))


if __name__ == "__main__":
    # inplanes = planes = 8, stride = 1; W*C = 128 so the lane axis is dense.
    T, B, C, H, W = 8, 2, 8, 16, 16
    planes = 8

    key = jax.random.PRNGKey(0)
    kx, kp = jax.random.split(key)
    x = jax.random.normal(kx, (T, B, C, H, W), jnp.float32)
    w1, sb1, w2, sb2 = make_params(kp, C, planes)

    out = basic_block_pallas(x, w1, sb1, w2, sb2)
    out = jax.block_until_ready(out)

    ref = ref_block(x, w1, sb1, w2, sb2)
    assert out.shape == (T, B, planes, H, W)
    # Outputs are binary spikes, so mean |diff| == mismatch fraction. Rounding
    # is matched between kernel and reference; only f32 accumulation order can
    # differ, so we allow a <0.5% spike-flip budget for borderline thresholds.
    err = float(jnp.mean(jnp.abs(out - ref)))
    assert err < 5e-3, f"spike mismatch fraction vs reference: {err}"

    print("KERNEL_OK")
</pallas_src>

<mosaic_0001>
module attributes {stable_mosaic.version = 11 : i64} {
  func.func @kernel(%arg0: i32, %arg1: i32, %arg2: memref<128x128xf32, #tpu.memory_space<vmem>>, %arg3: memref<384x128xbf16, #tpu.memory_space<vmem>>, %arg4: memref<1x128xf32, #tpu.memory_space<vmem>>, %arg5: memref<384x128xbf16, #tpu.memory_space<vmem>>, %arg6: memref<1x128xf32, #tpu.memory_space<vmem>>, %arg7: memref<128x128xf32, #tpu.memory_space<vmem>>, %arg8: memref<16x128xf32, #tpu.memory_space<vmem>>, %arg9: memref<16x128xf32, #tpu.memory_space<vmem>>, %arg10: memref<128x128xf32, #tpu.memory_space<vmem>>) attributes {dimension_semantics = [#tpu.dimension_semantics<parallel>, #tpu.dimension_semantics<arbitrary>], iteration_bounds = array<i64: 2, 1>, scalar_prefetch = 0 : i64, scratch_operands = 3 : i64, tpu.core_type = #tpu.core_type<tc>, window_params = [{transform_indices = @transform_0, window_bounds = array<i64: 128, 128>}, {pipeline_mode = #tpu.pipeline_mode<synchronous>, transform_indices = @transform_1, window_bounds = array<i64: 384, 128>}, {pipeline_mode = #tpu.pipeline_mode<synchronous>, transform_indices = @transform_2, window_bounds = array<i64: 1, 128>}, {pipeline_mode = #tpu.pipeline_mode<synchronous>, transform_indices = @transform_3, window_bounds = array<i64: 384, 128>}, {pipeline_mode = #tpu.pipeline_mode<synchronous>, transform_indices = @transform_4, window_bounds = array<i64: 1, 128>}, {transform_indices = @transform_5, window_bounds = array<i64: 128, 128>}]} {
    %c0_i32 = arith.constant 0 : i32
    %0 = arith.cmpi eq, %arg1, %c0_i32 : i32
    %1 = arith.extui %0 : i1 to i32
    %c0_i32_0 = arith.constant 0 : i32
    %2 = arith.cmpi ne, %1, %c0_i32_0 : i32
    scf.if %2 {
      %cst_214 = arith.constant 0.000000e+00 : f32
      %278 = vector.broadcast %cst_214 : f32 to vector<16x128xf32>
      %c0_215 = arith.constant 0 : index
      %c0_216 = arith.constant 0 : index
      %279 = vector.load %arg8[%c0_215, %c0_216] : memref<16x128xf32, #tpu.memory_space<vmem>>, vector<16x128xf32>
      tpu.vector_store %arg8[%c0_215, %c0_216], %278 {strides = array<i32>} : memref<16x128xf32, #tpu.memory_space<vmem>>, vector<16x128xf32>,
      %cst_217 = arith.constant 0.000000e+00 : f32
      %280 = vector.broadcast %cst_217 : f32 to vector<16x128xf32>
      %c0_218 = arith.constant 0 : index
      %c0_219 = arith.constant 0 : index
      %281 = vector.load %arg9[%c0_218, %c0_219] : memref<16x128xf32, #tpu.memory_space<vmem>>, vector<16x128xf32>
      tpu.vector_store %arg9[%c0_218, %c0_219], %280 {strides = array<i32>} : memref<16x128xf32, #tpu.memory_space<vmem>>, vector<16x128xf32>,
    } else {
    }
    %3 = tpu.iota {dimensions = array<i32: 0>} : vector<128x128xi32>
    %c16_i32 = arith.constant 16 : i32
    %c0_i32_1 = arith.constant 0 : i32
    %4 = arith.cmpi eq, %c16_i32, %c0_i32_1 : i32
    %c1_i32 = arith.constant 1 : i32
    %5 = arith.select %4, %c1_i32, %c16_i32 : i32
    %6 = vector.broadcast %5 : i32 to vector<128x128xi32>
    %7 = arith.remsi %3, %6 : vector<128x128xi32>
    %c0_i32_2 = arith.constant 0 : i32
    %8 = vector.broadcast %c0_i32_2 : i32 to vector<128x128xi32>
    %9 = arith.cmpi ne, %7, %8 : vector<128x128xi32>
    %c0_i32_3 = arith.constant 0 : i32
    %10 = vector.broadcast %c0_i32_3 : i32 to vector<128x128xi32>
    %11 = arith.cmpi slt, %7, %10 : vector<128x128xi32>
    %c0_i32_4 = arith.constant 0 : i32
    %12 = arith.cmpi slt, %5, %c0_i32_4 : i32
    %13 = vector.broadcast %12 : i1 to vector<128x128xi1>
    %14 = vector.broadcast %13 : vector<128x128xi1> to vector<128x128xi1>
    %15 = arith.xori %11, %14 : vector<128x128xi1>
    %16 = arith.andi %15, %9 : vector<128x128xi1>
    %17 = vector.broadcast %5 : i32 to vector<128x128xi32>
    %18 = arith.addi %7, %17 : vector<128x128xi32>
    %19 = arith.select %16, %18, %7 : vector<128x128xi1>, vector<128x128xi32>
    %c0_i32_5 = arith.constant 0 : i32
    %20 = vector.broadcast %c0_i32_5 : i32 to vector<128x128xi32>
    %21 = arith.cmpi eq, %19, %20 : vector<128x128xi32>
    %c15_i32 = arith.constant 15 : i32
    %22 = vector.broadcast %c15_i32 : i32 to vector<128x128xi32>
    %23 = arith.cmpi eq, %19, %22 : vector<128x128xi32>
    %c0 = arith.constant 0 : index
    %c0_6 = arith.constant 0 : index
    %24 = vector.load %arg2[%c0, %c0_6] : memref<128x128xf32, #tpu.memory_space<vmem>>, vector<128x128xf32>
    %c1_i32_7 = arith.constant 1 : i32
    %25 = tpu.dynamic_rotate %24 by %c1_i32_7 dim 0 : vector<128x128xf32>, i32 -> vector<128x128xf32>
    %cst = arith.constant 0.000000e+00 : f32
    %26 = vector.broadcast %cst : f32 to vector<128x128xf32>
    %27 = arith.select %21, %26, %25 : vector<128x128xi1>, vector<128x128xf32>
    %c127_i32 = arith.constant 127 : i32
    %28 = tpu.dynamic_rotate %24 by %c127_i32 dim 0 : vector<128x128xf32>, i32 -> vector<128x128xf32>
    %cst_8 = arith.constant 0.000000e+00 : f32
    %29 = vector.broadcast %cst_8 : f32 to vector<128x128xf32>
    %30 = arith.select %23, %29, %28 : vector<128x128xi1>, vector<128x128xf32>
    %31 = tpu.concatenate %27, %24, %30 in 1 : vector<128x128xf32>, vector<128x128xf32>, vector<128x128xf32> -> vector<128x384xf32>
    %32 = arith.truncf %31 : vector<128x384xf32> to vector<128x384xbf16>
    %c0_9 = arith.constant 0 : index
    %c0_10 = arith.constant 0 : index
    %33 = vector.load %arg3[%c0_9, %c0_10] : memref<384x128xbf16, #tpu.memory_space<vmem>>, vector<384x128xbf16>
    %cst_11 = arith.constant dense<0.000000e+00> : vector<128x128xf32>
    %34 = tpu.matmul %32, %33, %cst_11 {dimension_numbers = #tpu.dot_dimension_numbers<[1], [0], [0], [1], [0, 0, 1, 1], [], []>} : vector<128x384xbf16>, vector<384x128xbf16>, vector<128x128xf32> -> vector<128x128xf32>
    %c0_12 = arith.constant 0 : index
    %c0_13 = arith.constant 0 : index
    %35 = vector.load %arg4[%c0_12, %c0_13] : memref<1x128xf32, #tpu.memory_space<vmem>>, vector<1x128xf32>
    %36 = vector.broadcast %35 : vector<1x128xf32> to vector<128x128xf32>
    %37 = arith.addf %34, %36 : vector<128x128xf32>
    %c0_14 = arith.constant 0 : index
    %c0_15 = arith.constant 0 : index
    %38 = vector.load %arg10[%c0_14, %c0_15] : memref<128x128xf32, #tpu.memory_space<vmem>>, vector<128x128xf32>
    tpu.vector_store %arg10[%c0_14, %c0_15], %37 {strides = array<i32>} : memref<128x128xf32, #tpu.memory_space<vmem>>, vector<128x128xf32>,
    %c0_16 = arith.constant 0 : index
    %c0_17 = arith.constant 0 : index
    %39 = vector.load %arg8[%c0_16, %c0_17] : memref<16x128xf32, #tpu.memory_space<vmem>>, vector<16x128xf32>
    %cst_18 = arith.constant 3.000000e-01 : f32
    %40 = vector.broadcast %cst_18 : f32 to vector<16x128xf32>
    %41 = arith.mulf %40, %39 : vector<16x128xf32>
    %c0_19 = arith.constant 0 : index
    %c0_20 = arith.constant 0 : index
    %42 = vector.load %arg10[%c0_19, %c0_20] : memref<128x128xf32, #tpu.memory_space<vmem>>, vector<16x128xf32>
    %43 = arith.addf %41, %42 : vector<16x128xf32>
    %cst_21 = arith.constant 5.000000e-01 : f32
    %44 = vector.broadcast %cst_21 : f32 to vector<16x128xf32>
    %45 = arith.cmpf oge, %43, %44 : vector<16x128xf32>
    %cst_22 = arith.constant 0.000000e+00 : f32
    %46 = vector.broadcast %cst_22 : f32 to vector<16x128xf32>
    %47 = arith.select %45, %46, %43 : vector<16x128xi1>, vector<16x128xf32>
    %c0_23 = arith.constant 0 : index
    %c0_24 = arith.constant 0 : index
    %48 = vector.load %arg8[%c0_23, %c0_24] : memref<16x128xf32, #tpu.memory_space<vmem>>, vector<16x128xf32>
    tpu.vector_store %arg8[%c0_23, %c0_24], %47 {strides = array<i32>} : memref<16x128xf32, #tpu.memory_space<vmem>>, vector<16x128xf32>,
    %49 = arith.extui %45 : vector<16x128xi1> to vector<16x128xi32>
    %50 = arith.sitofp %49 : vector<16x128xi32> to vector<16x128xf32>
    %c0_25 = arith.constant 0 : index
    %c0_26 = arith.constant 0 : index
    %51 = vector.load %arg10[%c0_25, %c0_26] : memref<128x128xf32, #tpu.memory_space<vmem>>, vector<16x128xf32>
    tpu.vector_store %arg10[%c0_25, %c0_26], %50 {strides = array<i32>} : memref<128x128xf32, #tpu.memory_space<vmem>>, vector<16x128xf32>,
    %c0_27 = arith.constant 0 : index
    %c0_28 = arith.constant 0 : index
    %52 = vector.load %arg8[%c0_27, %c0_28] : memref<16x128xf32, #tpu.memory_space<vmem>>, vector<16x128xf32>
    %cst_29 = arith.constant 3.000000e-01 : f32
    %53 = vector.broadcast %cst_29 : f32 to vector<16x128xf32>
    %54 = arith.mulf %53, %52 : vector<16x128xf32>
    %c16 = arith.constant 16 : index
    %c0_30 = arith.constant 0 : index
    %55 = vector.load %arg10[%c16, %c0_30] : memref<128x128xf32, #tpu.memory_space<vmem>>, vector<16x128xf32>
    %56 = arith.addf %54, %55 : vector<16x128xf32>
    %cst_31 = arith.constant 5.000000e-01 : f32
    %57 = vector.broadcast %cst_31 : f32 to vector<16x128xf32>
    %58 = arith.cmpf oge, %56, %57 : vector<16x128xf32>
    %cst_32 = arith.constant 0.000000e+00 : f32
    %59 = vector.broadcast %cst_32 : f32 to vector<16x128xf32>
    %60 = arith.select %58, %59, %56 : vector<16x128xi1>, vector<16x128xf32>
    %c0_33 = arith.constant 0 : index
    %c0_34 = arith.constant 0 : index
    %61 = vector.load %arg8[%c0_33, %c0_34] : memref<16x128xf32, #tpu.memory_space<vmem>>, vector<16x128xf32>
    tpu.vector_store %arg8[%c0_33, %c0_34], %60 {strides = array<i32>} : memref<16x128xf32, #tpu.memory_space<vmem>>, vector<16x128xf32>,
    %62 = arith.extui %58 : vector<16x128xi1> to vector<16x128xi32>
    %63 = arith.sitofp %62 : vector<16x128xi32> to vector<16x128xf32>
    %c16_35 = arith.constant 16 : index
    %c0_36 = arith.constant 0 : index
    %64 = vector.load %arg10[%c16_35, %c0_36] : memref<128x128xf32, #tpu.memory_space<vmem>>, vector<16x128xf32>
    tpu.vector_store %arg10[%c16_35, %c0_36], %63 {strides = array<i32>} : memref<128x128xf32, #tpu.memory_space<vmem>>, vector<16x128xf32>,
    %c0_37 = arith.constant 0 : index
    %c0_38 = arith.constant 0 : index
    %65 = vector.load %arg8[%c0_37, %c0_38] : memref<16x128xf32, #tpu.memory_space<vmem>>, vector<16x128xf32>
    %cst_39 = arith.constant 3.000000e-01 : f32
    %66 = vector.broadcast %cst_39 : f32 to vector<16x128xf32>
    %67 = arith.mulf %66, %65 : vector<16x128xf32>
    %c32 = arith.constant 32 : index
    %c0_40 = arith.constant 0 : index
    %68 = vector.load %arg10[%c32, %c0_40] : memref<128x128xf32, #tpu.memory_space<vmem>>, vector<16x128xf32>
    %69 = arith.addf %67, %68 : vector<16x128xf32>
    %cst_41 = arith.constant 5.000000e-01 : f32
    %70 = vector.broadcast %cst_41 : f32 to vector<16x128xf32>
    %71 = arith.cmpf oge, %69, %70 : vector<16x128xf32>
    %cst_42 = arith.constant 0.000000e+00 : f32
    %72 = vector.broadcast %cst_42 : f32 to vector<16x128xf32>
    %73 = arith.select %71, %72, %69 : vector<16x128xi1>, vector<16x128xf32>
    %c0_43 = arith.constant 0 : index
    %c0_44 = arith.constant 0 : index
    %74 = vector.load %arg8[%c0_43, %c0_44] : memref<16x128xf32, #tpu.memory_space<vmem>>, vector<16x128xf32>
    tpu.vector_store %arg8[%c0_43, %c0_44], %73 {strides = array<i32>} : memref<16x128xf32, #tpu.memory_space<vmem>>, vector<16x128xf32>,
    %75 = arith.extui %71 : vector<16x128xi1> to vector<16x128xi32>
    %76 = arith.sitofp %75 : vector<16x128xi32> to vector<16x128xf32>
    %c32_45 = arith.constant 32 : index
    %c0_46 = arith.constant 0 : index
    %77 = vector.load %arg10[%c32_45, %c0_46] : memref<128x128xf32, #tpu.memory_space<vmem>>, vector<16x128xf32>
    tpu.vector_store %arg10[%c32_45, %c0_46], %76 {strides = array<i32>} : memref<128x128xf32, #tpu.memory_space<vmem>>, vector<16x128xf32>,
    %c0_47 = arith.constant 0 : index
    %c0_48 = arith.constant 0 : index
    %78 = vector.load %arg8[%c0_47, %c0_48] : memref<16x128xf32, #tpu.memory_space<vmem>>, vector<16x128xf32>
    %cst_49 = arith.constant 3.000000e-01 : f32
    %79 = vector.broadcast %cst_49 : f32 to vector<16x128xf32>
    %80 = arith.mulf %79, %78 : vector<16x128xf32>
    %c48 = arith.constant 48 : index
    %c0_50 = arith.constant 0 : index
    %81 = vector.load %arg10[%c48, %c0_50] : memref<128x128xf32, #tpu.memory_space<vmem>>, vector<16x128xf32>
    %82 = arith.addf %80, %81 : vector<16x128xf32>
    %cst_51 = arith.constant 5.000000e-01 : f32
    %83 = vector.broadcast %cst_51 : f32 to vector<16x128xf32>
    %84 = arith.cmpf oge, %82, %83 : vector<16x128xf32>
    %cst_52 = arith.constant 0.000000e+00 : f32
    %85 = vector.broadcast %cst_52 : f32 to vector<16x128xf32>
    %86 = arith.select %84, %85, %82 : vector<16x128xi1>, vector<16x128xf32>
    %c0_53 = arith.constant 0 : index
    %c0_54 = arith.constant 0 : index
    %87 = vector.load %arg8[%c0_53, %c0_54] : memref<16x128xf32, #tpu.memory_space<vmem>>, vector<16x128xf32>
    tpu.vector_store %arg8[%c0_53, %c0_54], %86 {strides = array<i32>} : memref<16x128xf32, #tpu.memory_space<vmem>>, vector<16x128xf32>,
    %88 = arith.extui %84 : vector<16x128xi1> to vector<16x128xi32>
    %89 = arith.sitofp %88 : vector<16x128xi32> to vector<16x128xf32>
    %c48_55 = arith.constant 48 : index
    %c0_56 = arith.constant 0 : index
    %90 = vector.load %arg10[%c48_55, %c0_56] : memref<128x128xf32, #tpu.memory_space<vmem>>, vector<16x128xf32>
    tpu.vector_store %arg10[%c48_55, %c0_56], %89 {strides = array<i32>} : memref<128x128xf32, #tpu.memory_space<vmem>>, vector<16x128xf32>,
    %c0_57 = arith.constant 0 : index
    %c0_58 = arith.constant 0 : index
    %91 = vector.load %arg8[%c0_57, %c0_58] : memref<16x128xf32, #tpu.memory_space<vmem>>, vector<16x128xf32>
    %cst_59 = arith.constant 3.000000e-01 : f32
    %92 = vector.broadcast %cst_59 : f32 to vector<16x128xf32>
    %93 = arith.mulf %92, %91 : vector<16x128xf32>
    %c64 = arith.constant 64 : index
    %c0_60 = arith.constant 0 : index
    %94 = vector.load %arg10[%c64, %c0_60] : memref<128x128xf32, #tpu.memory_space<vmem>>, vector<16x128xf32>
    %95 = arith.addf %93, %94 : vector<16x128xf32>
    %cst_61 = arith.constant 5.000000e-01 : f32
    %96 = vector.broadcast %cst_61 : f32 to vector<16x128xf32>
    %97 = arith.cmpf oge, %95, %96 : vector<16x128xf32>
    %cst_62 = arith.constant 0.000000e+00 : f32
    %98 = vector.broadcast %cst_62 : f32 to vector<16x128xf32>
    %99 = arith.select %97, %98, %95 : vector<16x128xi1>, vector<16x128xf32>
    %c0_63 = arith.constant 0 : index
    %c0_64 = arith.constant 0 : index
    %100 = vector.load %arg8[%c0_63, %c0_64] : memref<16x128xf32, #tpu.memory_space<vmem>>, vector<16x128xf32>
    tpu.vector_store %arg8[%c0_63, %c0_64], %99 {strides = array<i32>} : memref<16x128xf32, #tpu.memory_space<vmem>>, vector<16x128xf32>,
    %101 = arith.extui %97 : vector<16x128xi1> to vector<16x128xi32>
    %102 = arith.sitofp %101 : vector<16x128xi32> to vector<16x128xf32>
    %c64_65 = arith.constant 64 : index
    %c0_66 = arith.constant 0 : index
    %103 = vector.load %arg10[%c64_65, %c0_66] : memref<128x128xf32, #tpu.memory_space<vmem>>, vector<16x128xf32>
    tpu.vector_store %arg10[%c64_65, %c0_66], %102 {strides = array<i32>} : memref<128x128xf32, #tpu.memory_space<vmem>>, vector<16x128xf32>,
    %c0_67 = arith.constant 0 : index
    %c0_68 = arith.constant 0 : index
    %104 = vector.load %arg8[%c0_67, %c0_68] : memref<16x128xf32, #tpu.memory_space<vmem>>, vector<16x128xf32>
    %cst_69 = arith.constant 3.000000e-01 : f32
    %105 = vector.broadcast %cst_69 : f32 to vector<16x128xf32>
    %106 = arith.mulf %105, %104 : vector<16x128xf32>
    %c80 = arith.constant 80 : index
    %c0_70 = arith.constant 0 : index
    %107 = vector.load %arg10[%c80, %c0_70] : memref<128x128xf32, #tpu.memory_space<vmem>>, vector<16x128xf32>
    %108 = arith.addf %106, %107 : vector<16x128xf32>
    %cst_71 = arith.constant 5.000000e-01 : f32
    %109 = vector.broadcast %cst_71 : f32 to vector<16x128xf32>
    %110 = arith.cmpf oge, %108, %109 : vector<16x128xf32>
    %cst_72 = arith.constant 0.000000e+00 : f32
    %111 = vector.broadcast %cst_72 : f32 to vector<16x128xf32>
    %112 = arith.select %110, %111, %108 : vector<16x128xi1>, vector<16x128xf32>
    %c0_73 = arith.constant 0 : index
    %c0_74 = arith.constant 0 : index
    %113 = vector.load %arg8[%c0_73, %c0_74] : memref<16x128xf32, #tpu.memory_space<vmem>>, vector<16x128xf32>
    tpu.vector_store %arg8[%c0_73, %c0_74], %112 {strides = array<i32>} : memref<16x128xf32, #tpu.memory_space<vmem>>, vector<16x128xf32>,
    %114 = arith.extui %110 : vector<16x128xi1> to vector<16x128xi32>
    %115 = arith.sitofp %114 : vector<16x128xi32> to vector<16x128xf32>
    %c80_75 = arith.constant 80 : index
    %c0_76 = arith.constant 0 : index
    %116 = vector.load %arg10[%c80_75, %c0_76] : memref<128x128xf32, #tpu.memory_space<vmem>>, vector<16x128xf32>
    tpu.vector_store %arg10[%c80_75, %c0_76], %115 {strides = array<i32>} : memref<128x128xf32, #tpu.memory_space<vmem>>, vector<16x128xf32>,
    %c0_77 = arith.constant 0 : index
    %c0_78 = arith.constant 0 : index
    %117 = vector.load %arg8[%c0_77, %c0_78] : memref<16x128xf32, #tpu.memory_space<vmem>>, vector<16x128xf32>
    %cst_79 = arith.constant 3.000000e-01 : f32
    %118 = vector.broadcast %cst_79 : f32 to vector<16x128xf32>
    %119 = arith.mulf %118, %117 : vector<16x128xf32>
    %c96 = arith.constant 96 : index
    %c0_80 = arith.constant 0 : index
    %120 = vector.load %arg10[%c96, %c0_80] : memref<128x128xf32, #tpu.memory_space<vmem>>, vector<16x128xf32>
    %121 = arith.addf %119, %120 : vector<16x128xf32>
    %cst_81 = arith.constant 5.000000e-01 : f32
    %122 = vector.broadcast %cst_81 : f32 to vector<16x128xf32>
    %123 = arith.cmpf oge, %121, %122 : vector<16x128xf32>
    %cst_82 = arith.constant 0.000000e+00 : f32
    %124 = vector.broadcast %cst_82 : f32 to vector<16x128xf32>
    %125 = arith.select %123, %124, %121 : vector<16x128xi1>, vector<16x128xf32>
    %c0_83 = arith.constant 0 : index
    %c0_84 = arith.constant 0 : index
    %126 = vector.load %arg8[%c0_83, %c0_84] : memref<16x128xf32, #tpu.memory_space<vmem>>, vector<16x128xf32>
    tpu.vector_store %arg8[%c0_83, %c0_84], %125 {strides = array<i32>} : memref<16x128xf32, #tpu.memory_space<vmem>>, vector<16x128xf32>,
    %127 = arith.extui %123 : vector<16x128xi1> to vector<16x128xi32>
    %128 = arith.sitofp %127 : vector<16x128xi32> to vector<16x128xf32>
    %c96_85 = arith.constant 96 : index
    %c0_86 = arith.constant 0 : index
    %129 = vector.load %arg10[%c96_85, %c0_86] : memref<128x128xf32, #tpu.memory_space<vmem>>, vector<16x128xf32>
    tpu.vector_store %arg10[%c96_85, %c0_86], %128 {strides = array<i32>} : memref<128x128xf32, #tpu.memory_space<vmem>>, vector<16x128xf32>,
    %c0_87 = arith.constant 0 : index
    %c0_88 = arith.constant 0 : index
    %130 = vector.load %arg8[%c0_87, %c0_88] : memref<16x128xf32, #tpu.memory_space<vmem>>, vector<16x128xf32>
    %cst_89 = arith.constant 3.000000e-01 : f32
    %131 = vector.broadcast %cst_89 : f32 to vector<16x128xf32>
    %132 = arith.mulf %131, %130 : vector<16x128xf32>
    %c112 = arith.constant 112 : index
    %c0_90 = arith.constant 0 : index
    %133 = vector.load %arg10[%c112, %c0_90] : memref<128x128xf32, #tpu.memory_space<vmem>>, vector<16x128xf32>
    %134 = arith.addf %132, %133 : vector<16x128xf32>
    %cst_91 = arith.constant 5.000000e-01 : f32
    %135 = vector.broadcast %cst_91 : f32 to vector<16x128xf32>
    %136 = arith.cmpf oge, %134, %135 : vector<16x128xf32>
    %cst_92 = arith.constant 0.000000e+00 : f32
    %137 = vector.broadcast %cst_92 : f32 to vector<16x128xf32>
    %138 = arith.select %136, %137, %134 : vector<16x128xi1>, vector<16x128xf32>
    %c0_93 = arith.constant 0 : index
    %c0_94 = arith.constant 0 : index
    %139 = vector.load %arg8[%c0_93, %c0_94] : memref<16x128xf32, #tpu.memory_space<vmem>>, vector<16x128xf32>
    tpu.vector_store %arg8[%c0_93, %c0_94], %138 {strides = array<i32>} : memref<16x128xf32, #tpu.memory_space<vmem>>, vector<16x128xf32>,
    %140 = arith.extui %136 : vector<16x128xi1> to vector<16x128xi32>
    %141 = arith.sitofp %140 : vector<16x128xi32> to vector<16x128xf32>
    %c112_95 = arith.constant 112 : index
    %c0_96 = arith.constant 0 : index
    %142 = vector.load %arg10[%c112_95, %c0_96] : memref<128x128xf32, #tpu.memory_space<vmem>>, vector<16x128xf32>
    tpu.vector_store %arg10[%c112_95, %c0_96], %141 {strides = array<i32>} : memref<128x128xf32, #tpu.memory_space<vmem>>, vector<16x128xf32>,
    %c0_97 = arith.constant 0 : index
    %c0_98 = arith.constant 0 : index
    %143 = vector.load %arg10[%c0_97, %c0_98] : memref<128x128xf32, #tpu.memory_space<vmem>>, vector<128x128xf32>
    %c1_i32_99 = arith.constant 1 : i32
    %144 = tpu.dynamic_rotate %143 by %c1_i32_99 dim 0 : vector<128x128xf32>, i32 -> vector<128x128xf32>
    %cst_100 = arith.constant 0.000000e+00 : f32
    %145 = vector.broadcast %cst_100 : f32 to vector<128x128xf32>
    %146 = arith.select %21, %145, %144 : vector<128x128xi1>, vector<128x128xf32>
    %c127_i32_101 = arith.constant 127 : i32
    %147 = tpu.dynamic_rotate %143 by %c127_i32_101 dim 0 : vector<128x128xf32>, i32 -> vector<128x128xf32>
    %cst_102 = arith.constant 0.000000e+00 : f32
    %148 = vector.broadcast %cst_102 : f32 to vector<128x128xf32>
    %149 = arith.select %23, %148, %147 : vector<128x128xi1>, vector<128x128xf32>
    %150 = tpu.concatenate %146, %143, %149 in 1 : vector<128x128xf32>, vector<128x128xf32>, vector<128x128xf32> -> vector<128x384xf32>
    %151 = arith.truncf %150 : vector<128x384xf32> to vector<128x384xbf16>
    %c0_103 = arith.constant 0 : index
    %c0_104 = arith.constant 0 : index
    %152 = vector.load %arg5[%c0_103, %c0_104] : memref<384x128xbf16, #tpu.memory_space<vmem>>, vector<384x128xbf16>
    %cst_105 = arith.constant dense<0.000000e+00> : vector<128x128xf32>
    %153 = tpu.matmul %151, %152, %cst_105 {dimension_numbers = #tpu.dot_dimension_numbers<[1], [0], [0], [1], [0, 0, 1, 1], [], []>} : vector<128x384xbf16>, vector<384x128xbf16>, vector<128x128xf32> -> vector<128x128xf32>
    %c0_106 = arith.constant 0 : index
    %c0_107 = arith.constant 0 : index
    %154 = vector.load %arg6[%c0_106, %c0_107] : memref<1x128xf32, #tpu.memory_space<vmem>>, vector<1x128xf32>
    %155 = vector.broadcast %154 : vector<1x128xf32> to vector<128x128xf32>
    %156 = arith.addf %153, %155 : vector<128x128xf32>
    %c0_108 = arith.constant 0 : index
    %c0_109 = arith.constant 0 : index
    %157 = vector.load %arg10[%c0_108, %c0_109] : memref<128x128xf32, #tpu.memory_space<vmem>>, vector<128x128xf32>
    tpu.vector_store %arg10[%c0_108, %c0_109], %156 {strides = array<i32>} : memref<128x128xf32, #tpu.memory_space<vmem>>, vector<128x128xf32>,
    %c0_110 = arith.constant 0 : index
    %c0_111 = arith.constant 0 : index
    %158 = vector.load %arg10[%c0_110, %c0_111] : memref<128x128xf32, #tpu.memory_space<vmem>>, vector<16x128xf32>
    %c0_112 = arith.constant 0 : index
    %c0_113 = arith.constant 0 : index
    %159 = vector.load %arg2[%c0_112, %c0_113] : memref<128x128xf32, #tpu.memory_space<vmem>>, vector<16x128xf32>
    %160 = arith.addf %158, %159 : vector<16x128xf32>
    %c0_114 = arith.constant 0 : index
    %c0_115 = arith.constant 0 : index
    %161 = vector.load %arg9[%c0_114, %c0_115] : memref<16x128xf32, #tpu.memory_space<vmem>>, vector<16x128xf32>
    %cst_116 = arith.constant 3.000000e-01 : f32
    %162 = vector.broadcast %cst_116 : f32 to vector<16x128xf32>
    %163 = arith.mulf %162, %161 : vector<16x128xf32>
    %164 = arith.addf %163, %160 : vector<16x128xf32>
    %cst_117 = arith.constant 5.000000e-01 : f32
    %165 = vector.broadcast %cst_117 : f32 to vector<16x128xf32>
    %166 = arith.cmpf oge, %164, %165 : vector<16x128xf32>
    %cst_118 = arith.constant 0.000000e+00 : f32
    %167 = vector.broadcast %cst_118 : f32 to vector<16x128xf32>
    %168 = arith.select %166, %167, %164 : vector<16x128xi1>, vector<16x128xf32>
    %c0_119 = arith.constant 0 : index
    %c0_120 = arith.constant 0 : index
    %169 = vector.load %arg9[%c0_119, %c0_120] : memref<16x128xf32, #tpu.memory_space<vmem>>, vector<16x128xf32>
    tpu.vector_store %arg9[%c0_119, %c0_120], %168 {strides = array<i32>} : memref<16x128xf32, #tpu.memory_space<vmem>>, vector<16x128xf32>,
    %170 = arith.extui %166 : vector<16x128xi1> to vector<16x128xi32>
    %171 = arith.sitofp %170 : vector<16x128xi32> to vector<16x128xf32>
    %c0_121 = arith.constant 0 : index
    %c0_122 = arith.constant 0 : index
    %172 = vector.load %arg7[%c0_121, %c0_122] : memref<128x128xf32, #tpu.memory_space<vmem>>, vector<16x128xf32>
    tpu.vector_store %arg7[%c0_121, %c0_122], %171 {strides = array<i32>} : memref<128x128xf32, #tpu.memory_space<vmem>>, vector<16x128xf32>,
    %c16_123 = arith.constant 16 : index
    %c0_124 = arith.constant 0 : index
    %173 = vector.load %arg10[%c16_123, %c0_124] : memref<128x128xf32, #tpu.memory_space<vmem>>, vector<16x128xf32>
    %c16_125 = arith.constant 16 : index
    %c0_126 = arith.constant 0 : index
    %174 = vector.load %arg2[%c16_125, %c0_126] : memref<128x128xf32, #tpu.memory_space<vmem>>, vector<16x128xf32>
    %175 = arith.addf %173, %174 : vector<16x128xf32>
    %c0_127 = arith.constant 0 : index
    %c0_128 = arith.constant 0 : index
    %176 = vector.load %arg9[%c0_127, %c0_128] : memref<16x128xf32, #tpu.memory_space<vmem>>, vector<16x128xf32>
    %cst_129 = arith.constant 3.000000e-01 : f32
    %177 = vector.broadcast %cst_129 : f32 to vector<16x128xf32>
    %178 = arith.mulf %177, %176 : vector<16x128xf32>
    %179 = arith.addf %178, %175 : vector<16x128xf32>
    %cst_130 = arith.constant 5.000000e-01 : f32
    %180 = vector.broadcast %cst_130 : f32 to vector<16x128xf32>
    %181 = arith.cmpf oge, %179, %180 : vector<16x128xf32>
    %cst_131 = arith.constant 0.000000e+00 : f32
    %182 = vector.broadcast %cst_131 : f32 to vector<16x128xf32>
    %183 = arith.select %181, %182, %179 : vector<16x128xi1>, vector<16x128xf32>
    %c0_132 = arith.constant 0 : index
    %c0_133 = arith.constant 0 : index
    %184 = vector.load %arg9[%c0_132, %c0_133] : memref<16x128xf32, #tpu.memory_space<vmem>>, vector<16x128xf32>
    tpu.vector_store %arg9[%c0_132, %c0_133], %183 {strides = array<i32>} : memref<16x128xf32, #tpu.memory_space<vmem>>, vector<16x128xf32>,
    %185 = arith.extui %181 : vector<16x128xi1> to vector<16x128xi32>
    %186 = arith.sitofp %185 : vector<16x128xi32> to vector<16x128xf32>
    %c16_134 = arith.constant 16 : index
    %c0_135 = arith.constant 0 : index
    %187 = vector.load %arg7[%c16_134, %c0_135] : memref<128x128xf32, #tpu.memory_space<vmem>>, vector<16x128xf32>
    tpu.vector_store %arg7[%c16_134, %c0_135], %186 {strides = array<i32>} : memref<128x128xf32, #tpu.memory_space<vmem>>, vector<16x128xf32>,
    %c32_136 = arith.constant 32 : index
    %c0_137 = arith.constant 0 : index
    %188 = vector.load %arg10[%c32_136, %c0_137] : memref<128x128xf32, #tpu.memory_space<vmem>>, vector<16x128xf32>
    %c32_138 = arith.constant 32 : index
    %c0_139 = arith.constant 0 : index
    %189 = vector.load %arg2[%c32_138, %c0_139] : memref<128x128xf32, #tpu.memory_space<vmem>>, vector<16x128xf32>
    %190 = arith.addf %188, %189 : vector<16x128xf32>
    %c0_140 = arith.constant 0 : index
    %c0_141 = arith.constant 0 : index
    %191 = vector.load %arg9[%c0_140, %c0_141] : memref<16x128xf32, #tpu.memory_space<vmem>>, vector<16x128xf32>
    %cst_142 = arith.constant 3.000000e-01 : f32
    %192 = vector.broadcast %cst_142 : f32 to vector<16x128xf32>
    %193 = arith.mulf %192, %191 : vector<16x128xf32>
    %194 = arith.addf %193, %190 : vector<16x128xf32>
    %cst_143 = arith.constant 5.000000e-01 : f32
    %195 = vector.broadcast %cst_143 : f32 to vector<16x128xf32>
    %196 = arith.cmpf oge, %194, %195 : vector<16x128xf32>
    %cst_144 = arith.constant 0.000000e+00 : f32
    %197 = vector.broadcast %cst_144 : f32 to vector<16x128xf32>
    %198 = arith.select %196, %197, %194 : vector<16x128xi1>, vector<16x128xf32>
    %c0_145 = arith.constant 0 : index
    %c0_146 = arith.constant 0 : index
    %199 = vector.load %arg9[%c0_145, %c0_146] : memref<16x128xf32, #tpu.memory_space<vmem>>, vector<16x128xf32>
    tpu.vector_store %arg9[%c0_145, %c0_146], %198 {strides = array<i32>} : memref<16x128xf32, #tpu.memory_space<vmem>>, vector<16x128xf32>,
    %200 = arith.extui %196 : vector<16x128xi1> to vector<16x128xi32>
    %201 = arith.sitofp %200 : vector<16x128xi32> to vector<16x128xf32>
    %c32_147 = arith.constant 32 : index
    %c0_148 = arith.constant 0 : index
    %202 = vector.load %arg7[%c32_147, %c0_148] : memref<128x128xf32, #tpu.memory_space<vmem>>, vector<16x128xf32>
    tpu.vector_store %arg7[%c32_147, %c0_148], %201 {strides = array<i32>} : memref<128x128xf32, #tpu.memory_space<vmem>>, vector<16x128xf32>,
    %c48_149 = arith.constant 48 : index
    %c0_150 = arith.constant 0 : index
    %203 = vector.load %arg10[%c48_149, %c0_150] : memref<128x128xf32, #tpu.memory_space<vmem>>, vector<16x128xf32>
    %c48_151 = arith.constant 48 : index
    %c0_152 = arith.constant 0 : index
    %204 = vector.load %arg2[%c48_151, %c0_152] : memref<128x128xf32, #tpu.memory_space<vmem>>, vector<16x128xf32>
    %205 = arith.addf %203, %204 : vector<16x128xf32>
    %c0_153 = arith.constant 0 : index
    %c0_154 = arith.constant 0 : index
    %206 = vector.load %arg9[%c0_153, %c0_154] : memref<16x128xf32, #tpu.memory_space<vmem>>, vector<16x128xf32>
    %cst_155 = arith.constant 3.000000e-01 : f32
    %207 = vector.broadcast %cst_155 : f32 to vector<16x128xf32>
    %208 = arith.mulf %207, %206 : vector<16x128xf32>
    %209 = arith.addf %208, %205 : vector<16x128xf32>
    %cst_156 = arith.constant 5.000000e-01 : f32
    %210 = vector.broadcast %cst_156 : f32 to vector<16x128xf32>
    %211 = arith.cmpf oge, %209, %210 : vector<16x128xf32>
    %cst_157 = arith.constant 0.000000e+00 : f32
    %212 = vector.broadcast %cst_157 : f32 to vector<16x128xf32>
    %213 = arith.select %211, %212, %209 : vector<16x128xi1>, vector<16x128xf32>
    %c0_158 = arith.constant 0 : index
    %c0_159 = arith.constant 0 : index
    %214 = vector.load %arg9[%c0_158, %c0_159] : memref<16x128xf32, #tpu.memory_space<vmem>>, vector<16x128xf32>
    tpu.vector_store %arg9[%c0_158, %c0_159], %213 {strides = array<i32>} : memref<16x128xf32, #tpu.memory_space<vmem>>, vector<16x128xf32>,
    %215 = arith.extui %211 : vector<16x128xi1> to vector<16x128xi32>
    %216 = arith.sitofp %215 : vector<16x128xi32> to vector<16x128xf32>
    %c48_160 = arith.constant 48 : index
    %c0_161 = arith.constant 0 : index
    %217 = vector.load %arg7[%c48_160, %c0_161] : memref<128x128xf32, #tpu.memory_space<vmem>>, vector<16x128xf32>
    tpu.vector_store %arg7[%c48_160, %c0_161], %216 {strides = array<i32>} : memref<128x128xf32, #tpu.memory_space<vmem>>, vector<16x128xf32>,
    %c64_162 = arith.constant 64 : index
    %c0_163 = arith.constant 0 : index
    %218 = vector.load %arg10[%c64_162, %c0_163] : memref<128x128xf32, #tpu.memory_space<vmem>>, vector<16x128xf32>
    %c64_164 = arith.constant 64 : index
    %c0_165 = arith.constant 0 : index
    %219 = vector.load %arg2[%c64_164, %c0_165] : memref<128x128xf32, #tpu.memory_space<vmem>>, vector<16x128xf32>
    %220 = arith.addf %218, %219 : vector<16x128xf32>
    %c0_166 = arith.constant 0 : index
    %c0_167 = arith.constant 0 : index
    %221 = vector.load %arg9[%c0_166, %c0_167] : memref<16x128xf32, #tpu.memory_space<vmem>>, vector<16x128xf32>
    %cst_168 = arith.constant 3.000000e-01 : f32
    %222 = vector.broadcast %cst_168 : f32 to vector<16x128xf32>
    %223 = arith.mulf %222, %221 : vector<16x128xf32>
    %224 = arith.addf %223, %220 : vector<16x128xf32>
    %cst_169 = arith.constant 5.000000e-01 : f32
    %225 = vector.broadcast %cst_169 : f32 to vector<16x128xf32>
    %226 = arith.cmpf oge, %224, %225 : vector<16x128xf32>
    %cst_170 = arith.constant 0.000000e+00 : f32
    %227 = vector.broadcast %cst_170 : f32 to vector<16x128xf32>
    %228 = arith.select %226, %227, %224 : vector<16x128xi1>, vector<16x128xf32>
    %c0_171 = arith.constant 0 : index
    %c0_172 = arith.constant 0 : index
    %229 = vector.load %arg9[%c0_171, %c0_172] : memref<16x128xf32, #tpu.memory_space<vmem>>, vector<16x128xf32>
    tpu.vector_store %arg9[%c0_171, %c0_172], %228 {strides = array<i32>} : memref<16x128xf32, #tpu.memory_space<vmem>>, vector<16x128xf32>,
    %230 = arith.extui %226 : vector<16x128xi1> to vector<16x128xi32>
    %231 = arith.sitofp %230 : vector<16x128xi32> to vector<16x128xf32>
    %c64_173 = arith.constant 64 : index
    %c0_174 = arith.constant 0 : index
    %232 = vector.load %arg7[%c64_173, %c0_174] : memref<128x128xf32, #tpu.memory_space<vmem>>, vector<16x128xf32>
    tpu.vector_store %arg7[%c64_173, %c0_174], %231 {strides = array<i32>} : memref<128x128xf32, #tpu.memory_space<vmem>>, vector<16x128xf32>,
    %c80_175 = arith.constant 80 : index
    %c0_176 = arith.constant 0 : index
    %233 = vector.load %arg10[%c80_175, %c0_176] : memref<128x128xf32, #tpu.memory_space<vmem>>, vector<16x128xf32>
    %c80_177 = arith.constant 80 : index
    %c0_178 = arith.constant 0 : index
    %234 = vector.load %arg2[%c80_177, %c0_178] : memref<128x128xf32, #tpu.memory_space<vmem>>, vector<16x128xf32>
    %235 = arith.addf %233, %234 : vector<16x128xf32>
    %c0_179 = arith.constant 0 : index
    %c0_180 = arith.constant 0 : index
    %236 = vector.load %arg9[%c0_179, %c0_180] : memref<16x128xf32, #tpu.memory_space<vmem>>, vector<16x128xf32>
    %cst_181 = arith.constant 3.000000e-01 : f32
    %237 = vector.broadcast %cst_181 : f32 to vector<16x128xf32>
    %238 = arith.mulf %237, %236 : vector<16x128xf32>
    %239 = arith.addf %238, %235 : vector<16x128xf32>
    %cst_182 = arith.constant 5.000000e-01 : f32
    %240 = vector.broadcast %cst_182 : f32 to vector<16x128xf32>
    %241 = arith.cmpf oge, %239, %240 : vector<16x128xf32>
    %cst_183 = arith.constant 0.000000e+00 : f32
    %242 = vector.broadcast %cst_183 : f32 to vector<16x128xf32>
    %243 = arith.select %241, %242, %239 : vector<16x128xi1>, vector<16x128xf32>
    %c0_184 = arith.constant 0 : index
    %c0_185 = arith.constant 0 : index
    %244 = vector.load %arg9[%c0_184, %c0_185] : memref<16x128xf32, #tpu.memory_space<vmem>>, vector<16x128xf32>
    tpu.vector_store %arg9[%c0_184, %c0_185], %243 {strides = array<i32>} : memref<16x128xf32, #tpu.memory_space<vmem>>, vector<16x128xf32>,
    %245 = arith.extui %241 : vector<16x128xi1> to vector<16x128xi32>
    %246 = arith.sitofp %245 : vector<16x128xi32> to vector<16x128xf32>
    %c80_186 = arith.constant 80 : index
    %c0_187 = arith.constant 0 : index
    %247 = vector.load %arg7[%c80_186, %c0_187] : memref<128x128xf32, #tpu.memory_space<vmem>>, vector<16x128xf32>
    tpu.vector_store %arg7[%c80_186, %c0_187], %246 {strides = array<i32>} : memref<128x128xf32, #tpu.memory_space<vmem>>, vector<16x128xf32>,
    %c96_188 = arith.constant 96 : index
    %c0_189 = arith.constant 0 : index
    %248 = vector.load %arg10[%c96_188, %c0_189] : memref<128x128xf32, #tpu.memory_space<vmem>>, vector<16x128xf32>
    %c96_190 = arith.constant 96 : index
    %c0_191 = arith.constant 0 : index
    %249 = vector.load %arg2[%c96_190, %c0_191] : memref<128x128xf32, #tpu.memory_space<vmem>>, vector<16x128xf32>
    %250 = arith.addf %248, %249 : vector<16x128xf32>
    %c0_192 = arith.constant 0 : index
    %c0_193 = arith.constant 0 : index
    %251 = vector.load %arg9[%c0_192, %c0_193] : memref<16x128xf32, #tpu.memory_space<vmem>>, vector<16x128xf32>
    %cst_194 = arith.constant 3.000000e-01 : f32
    %252 = vector.broadcast %cst_194 : f32 to vector<16x128xf32>
    %253 = arith.mulf %252, %251 : vector<16x128xf32>
    %254 = arith.addf %253, %250 : vector<16x128xf32>
    %cst_195 = arith.constant 5.000000e-01 : f32
    %255 = vector.broadcast %cst_195 : f32 to vector<16x128xf32>
    %256 = arith.cmpf oge, %254, %255 : vector<16x128xf32>
    %cst_196 = arith.constant 0.000000e+00 : f32
    %257 = vector.broadcast %cst_196 : f32 to vector<16x128xf32>
    %258 = arith.select %256, %257, %254 : vector<16x128xi1>, vector<16x128xf32>
    %c0_197 = arith.constant 0 : index
    %c0_198 = arith.constant 0 : index
    %259 = vector.load %arg9[%c0_197, %c0_198] : memref<16x128xf32, #tpu.memory_space<vmem>>, vector<16x128xf32>
    tpu.vector_store %arg9[%c0_197, %c0_198], %258 {strides = array<i32>} : memref<16x128xf32, #tpu.memory_space<vmem>>, vector<16x128xf32>,
    %260 = arith.extui %256 : vector<16x128xi1> to vector<16x128xi32>
    %261 = arith.sitofp %260 : vector<16x128xi32> to vector<16x128xf32>
    %c96_199 = arith.constant 96 : index
    %c0_200 = arith.constant 0 : index
    %262 = vector.load %arg7[%c96_199, %c0_200] : memref<128x128xf32, #tpu.memory_space<vmem>>, vector<16x128xf32>
    tpu.vector_store %arg7[%c96_199, %c0_200], %261 {strides = array<i32>} : memref<128x128xf32, #tpu.memory_space<vmem>>, vector<16x128xf32>,
    %c112_201 = arith.constant 112 : index
    %c0_202 = arith.constant 0 : index
    %263 = vector.load %arg10[%c112_201, %c0_202] : memref<128x128xf32, #tpu.memory_space<vmem>>, vector<16x128xf32>
    %c112_203 = arith.constant 112 : index
    %c0_204 = arith.constant 0 : index
    %264 = vector.load %arg2[%c112_203, %c0_204] : memref<128x128xf32, #tpu.memory_space<vmem>>, vector<16x128xf32>
    %265 = arith.addf %263, %264 : vector<16x128xf32>
    %c0_205 = arith.constant 0 : index
    %c0_206 = arith.constant 0 : index
    %266 = vector.load %arg9[%c0_205, %c0_206] : memref<16x128xf32, #tpu.memory_space<vmem>>, vector<16x128xf32>
    %cst_207 = arith.constant 3.000000e-01 : f32
    %267 = vector.broadcast %cst_207 : f32 to vector<16x128xf32>
    %268 = arith.mulf %267, %266 : vector<16x128xf32>
    %269 = arith.addf %268, %265 : vector<16x128xf32>
    %cst_208 = arith.constant 5.000000e-01 : f32
    %270 = vector.broadcast %cst_208 : f32 to vector<16x128xf32>
    %271 = arith.cmpf oge, %269, %270 : vector<16x128xf32>
    %cst_209 = arith.constant 0.000000e+00 : f32
    %272 = vector.broadcast %cst_209 : f32 to vector<16x128xf32>
    %273 = arith.select %271, %272, %269 : vector<16x128xi1>, vector<16x128xf32>
    %c0_210 = arith.constant 0 : index
    %c0_211 = arith.constant 0 : index
    %274 = vector.load %arg9[%c0_210, %c0_211] : memref<16x128xf32, #tpu.memory_space<vmem>>, vector<16x128xf32>
    tpu.vector_store %arg9[%c0_210, %c0_211], %273 {strides = array<i32>} : memref<16x128xf32, #tpu.memory_space<vmem>>, vector<16x128xf32>,
    %275 = arith.extui %271 : vector<16x128xi1> to vector<16x128xi32>
    %276 = arith.sitofp %275 : vector<16x128xi32> to vector<16x128xf32>
    %c112_212 = arith.constant 112 : index
    %c0_213 = arith.constant 0 : index
    %277 = vector.load %arg7[%c112_212, %c0_213] : memref<128x128xf32, #tpu.memory_space<vmem>>, vector<16x128xf32>
    tpu.vector_store %arg7[%c112_212, %c0_213], %276 {strides = array<i32>} : memref<128x128xf32, #tpu.memory_space<vmem>>, vector<16x128xf32>,
    return
  }
  func.func @transform_0(%arg0: i32, %arg1: i32) -> (i32, i32) {
    %c1_i32 = arith.constant 1 : i32
    %0 = arith.muli %arg0, %c1_i32 : i32
    %1 = arith.addi %0, %arg1 : i32
    %c0_i32 = arith.constant 0 : i32
    %c0_i32_0 = arith.constant 0 : i32
    return %1, %c0_i32 : i32, i32
  }
  func.func @transform_1(%arg0: i32, %arg1: i32) -> (i32, i32) {
    %c0_i32 = arith.constant 0 : i32
    %c0_i32_0 = arith.constant 0 : i32
    %c0_i32_1 = arith.constant 0 : i32
    return %c0_i32, %c0_i32_0 : i32, i32
  }
  func.func @transform_2(%arg0: i32, %arg1: i32) -> (i32, i32) {
    %c0_i32 = arith.constant 0 : i32
    %c0_i32_0 = arith.constant 0 : i32
    %c0_i32_1 = arith.constant 0 : i32
    return %c0_i32, %c0_i32_0 : i32, i32
  }
  func.func @transform_3(%arg0: i32, %arg1: i32) -> (i32, i32) {
    %c0_i32 = arith.constant 0 : i32
    %c0_i32_0 = arith.constant 0 : i32
    %c0_i32_1 = arith.constant 0 : i32
    return %c0_i32, %c0_i32_0 : i32, i32
  }
  func.func @transform_4(%arg0: i32, %arg1: i32) -> (i32, i32) {
    %c0_i32 = arith.constant 0 : i32
    %c0_i32_0 = arith.constant 0 : i32
    %c0_i32_1 = arith.constant 0 : i32
    return %c0_i32, %c0_i32_0 : i32, i32
  }
  func.func @transform_5(%arg0: i32, %arg1: i32) -> (i32, i32) {
    %c1_i32 = arith.constant 1 : i32
    %0 = arith.muli %arg0, %c1_i32 : i32
    %1 = arith.addi %0, %arg1 : i32
    %c0_i32 = arith.constant 0 : i32
    %c0_i32_0 = arith.constant 0 : i32
    return %1, %c0_i32 : i32, i32
  }
}

</mosaic_0001>

<llo_original>
// kernel: tpu_custom_call.1
$region0: #{tpu_custom_call.1}
  #allocation0 [shape = 'u32[]', space=smem, size = 0x4, offset = 0x4, fixed_abs, tag = 'smem constant byte address 0x4 - core index']
  #allocation1 [shape = 'u32[144,128]{1,0:T(1,128)}', space=vmem, size = 0x12000, scoped, tag = 'internal scratch']
  #allocation2 [shape = 'f32[16,128]{1,0:T(8,128)}', space=vmem, size = 0x2000, scoped, tag = 'scratch operand']
  #allocation3 [shape = 'f32[16,128]{1,0:T(8,128)}', space=vmem, size = 0x2000, scoped, tag = 'scratch operand']
  #allocation4 [shape = 'f32[128,128]{1,0:T(8,128)}', space=vmem, size = 0x10000, scoped, tag = 'scratch operand']
  %s0 = inlined_call_operand.hbm [shape: f32[256,128], index: 0, kind: input, shape index: {}]
  %s1 = inlined_call_operand.hbm [shape: bf16[384,128], index: 1, kind: input, shape index: {}]
  %s2 = inlined_call_operand.vmem [shape: f32[1,128], index: 2, kind: input, shape index: {}]
  %s3 = inlined_call_operand.hbm [shape: bf16[384,128], index: 3, kind: input, shape index: {}]
  %s4 = inlined_call_operand.vmem [shape: f32[1,128], index: 4, kind: input, shape index: {}]
  %s5 = inlined_call_operand.hbm [shape: f32[256,128], index: 5, kind: output, shape index: {}]
  %s6 = sld [smem:[#allocation0]]
  $region69: #{tpu_custom_call.1} parent=0
    _
  %s8 = ssub.s32 1, %s6
  %s9 = scalar_select 0, %s8, %s6
  $region1: #{tpu_custom_call.1} parent=0
    #allocation5 [shape = 'u8[131072]{0}', space=vmem, size = 0x20000, scoped, tag = 'input window, operand 0']
    #allocation6 [shape = 's32[2]{0}', space=sflag, size = 0x8, scoped, tag = 'scoped memory for tpu_custom_call.1']
    #allocation7 [shape = 's32[2]{0}', space=sflag, size = 0x8, scoped, tag = 'scoped memory for tpu_custom_call.1']
    #allocation8 [shape = 'u8[98304]{0}', space=vmem, size = 0x18000, scoped, tag = 'input window, operand 1, single buffered']
    #allocation9 [shape = 's32[1]{0}', space=sflag, size = 0x4, scoped, tag = 'scoped memory for tpu_custom_call.1']
    #allocation10 [shape = 'u8[98304]{0}', space=vmem, size = 0x18000, scoped, tag = 'input window, operand 3, single buffered']
    #allocation11 [shape = 'u8[131072]{0}', space=vmem, size = 0x20000, scoped, tag = 'output window, operand 0']
    %10 = vsyncpa [#allocation6], 0
    %s11 = scalar_lea.sflag [#allocation6], 1
    %12 = vsyncpa %s11, 0
    %13 = vsyncpa [#allocation9], 0
    %14 = vsyncpa [#allocation7], 0
    %s15 = scalar_lea.sflag [#allocation7], 1
    %16 = vsyncpa %s15, 0
    loop: start=0, step=1, limit=4
    $region2: #{tpu_custom_call.1} parent=1 // loop_pre_header
      _
    $region3: #{tpu_custom_call.1} parent=1 // loop_header
      %s18 = sphi 0, %s22
      %p19 = scmp.ge.s32.totalorder %s18, 4
      %s25 = sphi 0, %s37
      %s26 = sphi 0, %s33
      %s27 = sphi 0, %s25
      %s28 = sphi 0, %s26
      %s29 = sphi 0, %s27
      %s30 = sphi 0, %s28
      %s42 = sphi 0, %s44
      %s45 = sphi 0, %s42
      %s46 = sphi 0, %s45
      %s62 = sphi 0, %s46
      %s66 = sphi 0, %s66
      %s68 = sphi 0, %s66
      %s69 = sphi 0, %s68
      %s83 = sphi 0, %s69
      %s87 = sphi 0, %s87
      %s89 = sphi 0, %s87
      %s90 = sphi 0, %s89
      %s104 = sphi 0, %s90
      %s108 = sphi 0, %s108
      %s110 = sphi 0, %s108
      %s111 = sphi 0, %s110
      %s125 = sphi 0, %s111
      %s129 = sphi 0, %s129
      %s131 = sphi 0, %s129
      %s132 = sphi 0, %s131
      %s146 = sphi 0, %s132
      %s154 = sphi 0, %s156
      %s157 = sphi 0, %s154
      %s158 = sphi 0, %s157
      %s174 = sphi 0, %s158
    $region4: #{tpu_custom_call.1} parent=1 // loop_header_branch
      %21 = sbr.rel (%p19) target = $region8
    $region5: #{tpu_custom_call.1} parent=1 // loop_body
      %s23 = ssub.s32 %s18, 1
      %s24 = ssub.s32 %s18, 2
      %s31 = sadd.s32 1, %s26
      %p32 = scmp.ge.s32.totalorder %s31, 1
      %s33 = scalar_select %p32, 0, %s31
      %s34 = sadd.s32 1, %s25
      %s35 = scalar_select %p32, %s34, %s25
      %p36 = scmp.ge.s32.totalorder %s35, 2
      %s37 = scalar_select %p36, 0, %s35
      %s38 = sadd.s32 %s25, %s26
      %s39 = sadd.s32 %s37, %s33
      %s40 = ssub.s32 %s38, %s39
      %p41 = scmp.eq.s32.totalorder %s40, 0
      %s43 = sadd.s32 %s42, 1
      %s44 = scalar_select %p41, %s42, %s43
      %p47 = pneg %p41
      %p48 = scmp.eq.s32.totalorder %s18, 1
      %p49 = por %p47, %p48
      %p50 = scmp.ne.s32.totalorder %s42, %s45
      %p51 = scmp.eq.s32.totalorder %s18, 0
      %p52 = por %p50, %p51
      %p53 = scmp.ne.s32.totalorder %s42, %s45
      %p54 = scmp.eq.s32.totalorder %s23, 1
      %p55 = por %p53, %p54
      %p56 = scmp.ne.s32.totalorder %s45, %s46
      %p57 = scmp.eq.s32.totalorder %s23, 0
      %p58 = por %p56, %p57
      %p59 = scmp.ne.s32.totalorder %s45, %s46
      %p60 = scmp.eq.s32.totalorder %s24, 1
      %p61 = por %p59, %p60
      %p63 = scmp.ne.s32.totalorder %s46, %s62
      %p64 = scmp.eq.s32.totalorder %s24, 0
      %p65 = por %p63, %p64
      %s67 = sadd.s32 %s66, 1
      %p70 = scmp.eq.s32.totalorder %s18, 1
      %p71 = scmp.ne.s32.totalorder %s66, %s68
      %p72 = scmp.eq.s32.totalorder %s18, 0
      %p73 = por %p71, %p72
      %p74 = scmp.ne.s32.totalorder %s66, %s68
      %p75 = scmp.eq.s32.totalorder %s23, 1
      %p76 = por %p74, %p75
      %p77 = scmp.ne.s32.totalorder %s68, %s69
      %p78 = scmp.eq.s32.totalorder %s23, 0
      %p79 = por %p77, %p78
      %p80 = scmp.ne.s32.totalorder %s68, %s69
      %p81 = scmp.eq.s32.totalorder %s24, 1
      %p82 = por %p80, %p81
      %p84 = scmp.ne.s32.totalorder %s69, %s83
      %p85 = scmp.eq.s32.totalorder %s24, 0
      %p86 = por %p84, %p85
      %s88 = sadd.s32 %s87, 1
      %p91 = scmp.eq.s32.totalorder %s18, 1
      %p92 = scmp.ne.s32.totalorder %s87, %s89
      %p93 = scmp.eq.s32.totalorder %s18, 0
      %p94 = por %p92, %p93
      %p95 = scmp.ne.s32.totalorder %s87, %s89
      %p96 = scmp.eq.s32.totalorder %s23, 1
      %p97 = por %p95, %p96
      %p98 = scmp.ne.s32.totalorder %s89, %s90
      %p99 = scmp.eq.s32.totalorder %s23, 0
      %p100 = por %p98, %p99
      %p101 = scmp.ne.s32.totalorder %s89, %s90
      %p102 = scmp.eq.s32.totalorder %s24, 1
      %p103 = por %p101, %p102
      %p105 = scmp.ne.s32.totalorder %s90, %s104
      %p106 = scmp.eq.s32.totalorder %s24, 0
      %p107 = por %p105, %p106
      %s109 = sadd.s32 %s108, 1
      %p112 = scmp.eq.s32.totalorder %s18, 1
      %p113 = scmp.ne.s32.totalorder %s108, %s110
      %p114 = scmp.eq.s32.totalorder %s18, 0
      %p115 = por %p113, %p114
      %p116 = scmp.ne.s32.totalorder %s108, %s110
      %p117 = scmp.eq.s32.totalorder %s23, 1
      %p118 = por %p116, %p117
      %p119 = scmp.ne.s32.totalorder %s110, %s111
      %p120 = scmp.eq.s32.totalorder %s23, 0
      %p121 = por %p119, %p120
      %p122 = scmp.ne.s32.totalorder %s110, %s111
      %p123 = scmp.eq.s32.totalorder %s24, 1
      %p124 = por %p122, %p123
      %p126 = scmp.ne.s32.totalorder %s111, %s125
      %p127 = scmp.eq.s32.totalorder %s24, 0
      %p128 = por %p126, %p127
      %s130 = sadd.s32 %s129, 1
      %p133 = scmp.eq.s32.totalorder %s18, 1
      %p134 = scmp.ne.s32.totalorder %s129, %s131
      %p135 = scmp.eq.s32.totalorder %s18, 0
      %p136 = por %p134, %p135
      %p137 = scmp.ne.s32.totalorder %s129, %s131
      %p138 = scmp.eq.s32.totalorder %s23, 1
      %p139 = por %p137, %p138
      %p140 = scmp.ne.s32.totalorder %s131, %s132
      %p141 = scmp.eq.s32.totalorder %s23, 0
      %p142 = por %p140, %p141
      %p143 = scmp.ne.s32.totalorder %s131, %s132
      %p144 = scmp.eq.s32.totalorder %s24, 1
      %p145 = por %p143, %p144
      %p147 = scmp.ne.s32.totalorder %s132, %s146
      %p148 = scmp.eq.s32.totalorder %s24, 0
      %p149 = por %p147, %p148
      %s150 = sadd.s32 %s25, %s26
      %s151 = sadd.s32 %s37, %s33
      %s152 = ssub.s32 %s150, %s151
      %p153 = scmp.eq.s32.totalorder %s152, 0
      %s155 = sadd.s32 %s154, 1
      %s156 = scalar_select %p153, %s154, %s155
      %p159 = pneg %p153
      %p160 = scmp.eq.s32.totalorder %s18, 1
      %p161 = por %p159, %p160
      %p162 = scmp.ne.s32.totalorder %s154, %s157
      %p163 = scmp.eq.s32.totalorder %s18, 0
      %p164 = por %p162, %p163
      %p165 = scmp.ne.s32.totalorder %s154, %s157
      %p166 = scmp.eq.s32.totalorder %s23, 1
      %p167 = por %p165, %p166
      %p168 = scmp.ne.s32.totalorder %s157, %s158
      %p169 = scmp.eq.s32.totalorder %s23, 0
      %p170 = por %p168, %p169
      %p171 = scmp.ne.s32.totalorder %s157, %s158
      %p172 = scmp.eq.s32.totalorder %s24, 1
      %p173 = por %p171, %p172
      %p175 = scmp.ne.s32.totalorder %s158, %s174
      %p176 = scmp.eq.s32.totalorder %s24, 0
      %p177 = por %p175, %p176
      %p178 = scmp.le.s32.totalorder 1, %s18
      %p179 = scmp.lt.s32.totalorder %s18, 3
      %p180 = pnand %p178, %p179
      %p181 = pneg %p180
      // Predicated region
      $region9: #{tpu_custom_call.1} parent=5 // pred_check
        _
      $region10: #{tpu_custom_call.1} parent=5 // pred_check_branch
        %183 = sbr.rel (%p180) target = $region12
      $region11: #{tpu_custom_call.1} parent=5 // pred_region
        %s184 = ssub.s32 %s18, 1
        // Predicated region
        $region13: #{tpu_custom_call.1} parent=11 // pred_check
          %p185 = pneg %p79
        $region14: #{tpu_custom_call.1} parent=11 // pred_check_branch
          %187 = sbr.rel (%p185) target = $region16
        $region15: #{tpu_custom_call.1} parent=11 // pred_region
          %s189 = ssub.s32 3072, 3072
          %190 = vsyncadd [#allocation9], %s189
          %s191 = sshll.u32 [#allocation8], 4
          %s192 = int_to_ptr.vmem [resolvable:$true] %s191
          %197 = dma.hbm_to_vmem [thread:$0]  %s1, 3072, %s192, [#allocation9], 64, 64, 4
        $region16: #{tpu_custom_call.1} parent=11 // pred_fallthru
          _
        // Predicated region
        $region17: #{tpu_custom_call.1} parent=11 // pred_check
          %p198 = pneg %p100
        $region18: #{tpu_custom_call.1} parent=11 // pred_check_branch
          %200 = sbr.rel (%p198) target = $region20
        $region19: #{tpu_custom_call.1} parent=11 // pred_region
          _
        $region20: #{tpu_custom_call.1} parent=11 // pred_fallthru
          _
        // Predicated region
        $region21: #{tpu_custom_call.1} parent=11 // pred_check
          %p201 = pneg %p121
        $region22: #{tpu_custom_call.1} parent=11 // pred_check_branch
          %203 = sbr.rel (%p201) target = $region24
        $region23: #{tpu_custom_call.1} parent=11 // pred_region
          %s205 = ssub.s32 3072, 3072
          %206 = vsyncadd [#allocation9], %s205
          %s207 = sshll.u32 [#allocation10], 4
          %s208 = int_to_ptr.vmem [resolvable:$true] %s207
          %213 = dma.hbm_to_vmem [thread:$0]  %s3, 3072, %s208, [#allocation9], 64, 64, 4
        $region24: #{tpu_custom_call.1} parent=11 // pred_fallthru
          _
        // Predicated region
        $region25: #{tpu_custom_call.1} parent=11 // pred_check
          %p214 = pneg %p142
        $region26: #{tpu_custom_call.1} parent=11 // pred_check_branch
          %216 = sbr.rel (%p214) target = $region28
        $region27: #{tpu_custom_call.1} parent=11 // pred_region
          _
        $region28: #{tpu_custom_call.1} parent=11 // pred_fallthru
          _
      $region12: #{tpu_custom_call.1} parent=5 // pred_fallthru
        _
      %p217 = scmp.lt.s32.totalorder %s18, 2
      // Predicated region
      $region29: #{tpu_custom_call.1} parent=5 // pred_check
        %p218 = pneg %p217
      $region30: #{tpu_custom_call.1} parent=5 // pred_check_branch
        %220 = sbr.rel (%p218) target = $region32
      $region31: #{tpu_custom_call.1} parent=5 // pred_region
        // Predicated region
        $region33: #{tpu_custom_call.1} parent=31 // pred_check
          %p221 = pneg %p52
        $region34: #{tpu_custom_call.1} parent=31 // pred_check_branch
          %223 = sbr.rel (%p221) target = $region36
        $region35: #{tpu_custom_call.1} parent=31 // pred_region
          %s224 = sand.u32 %s42, 1
          %s225 = scalar_lea.sflag [#allocation6], %s224
          %s226 = sand.u32 %s42, 1
          %s227 = smul.addr %s226, 128
          %s228 = scalar_lea.vmem [#allocation5], %s227
          %s229 = sadd.s32 %s25, %s26
          %s230 = smul.u32 16, %s229
          %s232 = ssub.s32 2048, 2048
          %233 = vsyncadd %s225, %s232
          %s234 = smul.addr %s230, 128
          %s235 = scalar_lea.hbm %s0, %s234
          %s236 = sshll.u32 %s228, 4
          %s237 = int_to_ptr.vmem [resolvable:$true] %s236
          %242 = dma.hbm_to_vmem [thread:$0]  %s235, 2048, %s237, %s225, 128, 128, 8
        $region36: #{tpu_custom_call.1} parent=31 // pred_fallthru
          _
      $region32: #{tpu_custom_call.1} parent=5 // pred_fallthru
        _
      %p243 = scmp.le.s32.totalorder 1, %s18
      %p244 = scmp.lt.s32.totalorder %s18, 3
      %p245 = pnand %p243, %p244
      %p246 = pneg %p245
      // Predicated region
      $region37: #{tpu_custom_call.1} parent=5 // pred_check
        _
      $region38: #{tpu_custom_call.1} parent=5 // pred_check_branch
        %248 = sbr.rel (%p245) target = $region40
      $region39: #{tpu_custom_call.1} parent=5 // pred_region
        %s249 = ssub.s32 %s18, 1
        %s250 = sand.u32 %s45, 1
        %s251 = scalar_lea.sflag [#allocation6], %s250
        %s252 = sand.u32 %s45, 1
        %s253 = smul.addr %s252, 128
        %s254 = scalar_lea.vmem [#allocation5], %s253
        // Predicated region
        $region41: #{tpu_custom_call.1} parent=39 // pred_check
          %p255 = pneg %p58
        $region42: #{tpu_custom_call.1} parent=39 // pred_check_branch
          %257 = sbr.rel (%p255) target = $region44
        $region43: #{tpu_custom_call.1} parent=39 // pred_region
          %258 = dma.done %s251, 2048
        $region44: #{tpu_custom_call.1} parent=39 // pred_fallthru
          _
        // Predicated region
        $region45: #{tpu_custom_call.1} parent=39 // pred_check
          %p259 = pneg %p79
        $region46: #{tpu_custom_call.1} parent=39 // pred_check_branch
          %261 = sbr.rel (%p259) target = $region48
        $region47: #{tpu_custom_call.1} parent=39 // pred_region
          %262 = dma.done [#allocation9], 3072
        $region48: #{tpu_custom_call.1} parent=39 // pred_fallthru
          _
        // Predicated region
        $region49: #{tpu_custom_call.1} parent=39 // pred_check
          %p263 = pneg %p121
        $region50: #{tpu_custom_call.1} parent=39 // pred_check_branch
          %265 = sbr.rel (%p263) target = $region52
        $region51: #{tpu_custom_call.1} parent=39 // pred_region
          %266 = dma.done [#allocation9], 3072
        $region52: #{tpu_custom_call.1} parent=39 // pred_fallthru
          _
        %s267 = sand.u32 %s45, 1
        %s268 = scalar_lea.sflag [#allocation6], %s267
        %s269 = sand.u32 %s45, 1
        %s270 = smul.addr %s269, 128
        %s271 = scalar_lea.vmem [#allocation5], %s270
        %p272 = pneg %p58
        %p273 = pneg %p55
        %p274 = pneg %p79
        %p275 = pneg %p76
        %p276 = pneg %p100
        %p277 = pneg %p97
        %p278 = pneg %p121
        %p279 = pneg %p118
        %p280 = pneg %p142
        %p281 = pneg %p139
        %p282 = pneg %p170
        %p283 = pneg %p167
        %s284 = sand.u32 %s157, 1
        %s285 = scalar_lea.sflag [#allocation7], %s284
        %s286 = sand.u32 %s157, 1
        %s287 = smul.addr %s286, 128
        %s288 = scalar_lea.vmem [#allocation11], %s287
        %s289 = sadd.s32 %s27, %s28
        %s290 = smul.u32 16, %s289
        %s291 = sadd.s32 %s27, %s28
        %s292 = smul.u32 16, %s291
        %p294 = scmp.eq.s32.totalorder %s28, 0
        // Predicated region
        $region53: #{tpu_custom_call.1} parent=39 // pred_check
          %p295 = pneg %p294
        $region54: #{tpu_custom_call.1} parent=39 // pred_check_branch
          %297 = sbr.rel (%p295) target = $region56
        $region55: #{tpu_custom_call.1} parent=39 // pred_region
          %298 = vst [vmem:[#allocation2] sm:$0xff] 0.0
          %299 = vst [vmem:[#allocation2 + $0x8] sm:$0xff] 0.0
          %300 = vst [vmem:[#allocation3] sm:$0xff] 0.0
          %301 = vst [vmem:[#allocation3 + $0x8] sm:$0xff] 0.0
        $region56: #{tpu_custom_call.1} parent=39 // pred_fallthru
          _
        %v302 = vlaneseq
        %v303 = vshrl.u32 %v302, 7
        %v304 = vadd.s32 %v303, 8
        %v305 = vadd.s32 %v303, 16
        %v306 = vadd.s32 %v303, 24
        %v307 = vadd.s32 %v303, 32
        %v308 = vadd.s32 %v303, 40
        %v309 = vadd.s32 %v303, 48
        %v310 = vadd.s32 %v303, 56
        %v311 = vadd.s32 %v303, 64
        %v312 = vadd.s32 %v303, 72
        %v313 = vadd.s32 %v303, 80
        %v314 = vadd.s32 %v303, 88
        %v315 = vadd.s32 %v303, 96
        %v316 = vadd.s32 %v303, 104
        %v317 = vadd.s32 %v303, 112
        %v318 = vadd.s32 %v303, 120
        %vm319 = vcmp.lt.s32.totalorder %v303, 0
        %v320 = vsub.s32 0, %v303
        %v321 = vsel %vm319, %v320, %v303
        %v322 = vshrl.u32 %v321, 4
        %v323 = vand.u32 %v321, 15
        %v324 = vsub.s32 0, %v323
        %v325 = vsel %vm319, %v324, %v323
        %vm326 = vcmp.lt.s32.totalorder %v304, 0
        %v327 = vsub.s32 0, %v304
        %v328 = vsel %vm326, %v327, %v304
        %v329 = vshrl.u32 %v328, 4
        %v330 = vand.u32 %v328, 15
        %v331 = vsub.s32 0, %v330
        %v332 = vsel %vm326, %v331, %v330
        %vm333 = vcmp.lt.s32.totalorder %v305, 0
        %v334 = vsub.s32 0, %v305
        %v335 = vsel %vm333, %v334, %v305
        %v336 = vshrl.u32 %v335, 4
        %v337 = vand.u32 %v335, 15
        %v338 = vsub.s32 0, %v337
        %v339 = vsel %vm333, %v338, %v337
        %vm340 = vcmp.lt.s32.totalorder %v306, 0
        %v341 = vsub.s32 0, %v306
        %v342 = vsel %vm340, %v341, %v306
        %v343 = vshrl.u32 %v342, 4
        %v344 = vand.u32 %v342, 15
        %v345 = vsub.s32 0, %v344
        %v346 = vsel %vm340, %v345, %v344
        %vm347 = vcmp.lt.s32.totalorder %v307, 0
        %v348 = vsub.s32 0, %v307
        %v349 = vsel %vm347, %v348, %v307
        %v350 = vshrl.u32 %v349, 4
        %v351 = vand.u32 %v349, 15
        %v352 = vsub.s32 0, %v351
        %v353 = vsel %vm347, %v352, %v351
        %vm354 = vcmp.lt.s32.totalorder %v308, 0
        %v355 = vsub.s32 0, %v308
        %v356 = vsel %vm354, %v355, %v308
        %v357 = vshrl.u32 %v356, 4
        %v358 = vand.u32 %v356, 15
        %v359 = vsub.s32 0, %v358
        %v360 = vsel %vm354, %v359, %v358
        %vm361 = vcmp.lt.s32.totalorder %v309, 0
        %v362 = vsub.s32 0, %v309
        %v363 = vsel %vm361, %v362, %v309
        %v364 = vshrl.u32 %v363, 4
        %v365 = vand.u32 %v363, 15
        %v366 = vsub.s32 0, %v365
        %v367 = vsel %vm361, %v366, %v365
        %vm368 = vcmp.lt.s32.totalorder %v310, 0
        %v369 = vsub.s32 0, %v310
        %v370 = vsel %vm368, %v369, %v310
        %v371 = vshrl.u32 %v370, 4
        %v372 = vand.u32 %v370, 15
        %v373 = vsub.s32 0, %v372
        %v374 = vsel %vm368, %v373, %v372
        %vm375 = vcmp.lt.s32.totalorder %v311, 0
        %v376 = vsub.s32 0, %v311
        %v377 = vsel %vm375, %v376, %v311
        %v378 = vshrl.u32 %v377, 4
        %v379 = vand.u32 %v377, 15
        %v380 = vsub.s32 0, %v379
        %v381 = vsel %vm375, %v380, %v379
        %vm382 = vcmp.lt.s32.totalorder %v312, 0
        %v383 = vsub.s32 0, %v312
        %v384 = vsel %vm382, %v383, %v312
        %v385 = vshrl.u32 %v384, 4
        %v386 = vand.u32 %v384, 15
        %v387 = vsub.s32 0, %v386
        %v388 = vsel %vm382, %v387, %v386
        %vm389 = vcmp.lt.s32.totalorder %v313, 0
        %v390 = vsub.s32 0, %v313
        %v391 = vsel %vm389, %v390, %v313
        %v392 = vshrl.u32 %v391, 4
        %v393 = vand.u32 %v391, 15
        %v394 = vsub.s32 0, %v393
        %v395 = vsel %vm389, %v394, %v393
        %vm396 = vcmp.lt.s32.totalorder %v314, 0
        %v397 = vsub.s32 0, %v314
        %v398 = vsel %vm396, %v397, %v314
        %v399 = vshrl.u32 %v398, 4
        %v400 = vand.u32 %v398, 15
        %v401 = vsub.s32 0, %v400
        %v402 = vsel %vm396, %v401, %v400
        %vm403 = vcmp.lt.s32.totalorder %v315, 0
        %v404 = vsub.s32 0, %v315
        %v405 = vsel %vm403, %v404, %v315
        %v406 = vshrl.u32 %v405, 4
        %v407 = vand.u32 %v405, 15
        %v408 = vsub.s32 0, %v407
        %v409 = vsel %vm403, %v408, %v407
        %vm410 = vcmp.lt.s32.totalorder %v316, 0
        %v411 = vsub.s32 0, %v316
        %v412 = vsel %vm410, %v411, %v316
        %v413 = vshrl.u32 %v412, 4
        %v414 = vand.u32 %v412, 15
        %v415 = vsub.s32 0, %v414
        %v416 = vsel %vm410, %v415, %v414
        %vm417 = vcmp.lt.s32.totalorder %v317, 0
        %v418 = vsub.s32 0, %v317
        %v419 = vsel %vm417, %v418, %v317
        %v420 = vshrl.u32 %v419, 4
        %v421 = vand.u32 %v419, 15
        %v422 = vsub.s32 0, %v421
        %v423 = vsel %vm417, %v422, %v421
        %vm424 = vcmp.lt.s32.totalorder %v318, 0
        %v425 = vsub.s32 0, %v318
        %v426 = vsel %vm424, %v425, %v318
        %v427 = vshrl.u32 %v426, 4
        %v428 = vand.u32 %v426, 15
        %v429 = vsub.s32 0, %v428
        %v430 = vsel %vm424, %v429, %v428
        %vm431 = vcmp.ne.s32.totalorder %v325, 0
        %vm432 = vcmp.ne.s32.totalorder %v332, 0
        %vm433 = vcmp.ne.s32.totalorder %v339, 0
        %vm434 = vcmp.ne.s32.totalorder %v346, 0
        %vm435 = vcmp.ne.s32.totalorder %v353, 0
        %vm436 = vcmp.ne.s32.totalorder %v360, 0
        %vm437 = vcmp.ne.s32.totalorder %v367, 0
        %vm438 = vcmp.ne.s32.totalorder %v374, 0
        %vm439 = vcmp.ne.s32.totalorder %v381, 0
        %vm440 = vcmp.ne.s32.totalorder %v388, 0
        %vm441 = vcmp.ne.s32.totalorder %v395, 0
        %vm442 = vcmp.ne.s32.totalorder %v402, 0
        %vm443 = vcmp.ne.s32.totalorder %v409, 0
        %vm444 = vcmp.ne.s32.totalorder %v416, 0
        %vm445 = vcmp.ne.s32.totalorder %v423, 0
        %vm446 = vcmp.ne.s32.totalorder %v430, 0
        %vm447 = vcmp.lt.s32.totalorder %v325, 0
        %vm448 = vcmp.lt.s32.totalorder %v332, 0
        %vm449 = vcmp.lt.s32.totalorder %v339, 0
        %vm450 = vcmp.lt.s32.totalorder %v346, 0
        %vm451 = vcmp.lt.s32.totalorder %v353, 0
        %vm452 = vcmp.lt.s32.totalorder %v360, 0
        %vm453 = vcmp.lt.s32.totalorder %v367, 0
        %vm454 = vcmp.lt.s32.totalorder %v374, 0
        %vm455 = vcmp.lt.s32.totalorder %v381, 0
        %vm456 = vcmp.lt.s32.totalorder %v388, 0
        %vm457 = vcmp.lt.s32.totalorder %v395, 0
        %vm458 = vcmp.lt.s32.totalorder %v402, 0
        %vm459 = vcmp.lt.s32.totalorder %v409, 0
        %vm460 = vcmp.lt.s32.totalorder %v416, 0
        %vm461 = vcmp.lt.s32.totalorder %v423, 0
        %vm462 = vcmp.lt.s32.totalorder %v430, 0
        %vm463 = vmand %vm447, %vm431
        %vm464 = vmand %vm448, %vm432
        %vm465 = vmand %vm449, %vm433
        %vm466 = vmand %vm450, %vm434
        %vm467 = vmand %vm451, %vm435
        %vm468 = vmand %vm452, %vm436
        %vm469 = vmand %vm453, %vm437
        %vm470 = vmand %vm454, %vm438
        %vm471 = vmand %vm455, %vm439
        %vm472 = vmand %vm456, %vm440
        %vm473 = vmand %vm457, %vm441
        %vm474 = vmand %vm458, %vm442
        %vm475 = vmand %vm459, %vm443
        %vm476 = vmand %vm460, %vm444
        %vm477 = vmand %vm461, %vm445
        %vm478 = vmand %vm462, %vm446
        %v479 = vadd.s32 %v325, 16
        %v480 = vadd.s32 %v332, 16
        %v481 = vadd.s32 %v339, 16
        %v482 = vadd.s32 %v346, 16
        %v483 = vadd.s32 %v353, 16
        %v484 = vadd.s32 %v360, 16
        %v485 = vadd.s32 %v367, 16
        %v486 = vadd.s32 %v374, 16
        %v487 = vadd.s32 %v381, 16
        %v488 = vadd.s32 %v388, 16
        %v489 = vadd.s32 %v395, 16
        %v490 = vadd.s32 %v402, 16
        %v491 = vadd.s32 %v409, 16
        %v492 = vadd.s32 %v416, 16
        %v493 = vadd.s32 %v423, 16
        %v494 = vadd.s32 %v430, 16
        %v495 = vsel %vm463, %v479, %v325
        %v496 = vsel %vm464, %v480, %v332
        %v497 = vsel %vm465, %v481, %v339
        %v498 = vsel %vm466, %v482, %v346
        %v499 = vsel %vm467, %v483, %v353
        %v500 = vsel %vm468, %v484, %v360
        %v501 = vsel %vm469, %v485, %v367
        %v502 = vsel %vm470, %v486, %v374
        %v503 = vsel %vm471, %v487, %v381
        %v504 = vsel %vm472, %v488, %v388
        %v505 = vsel %vm473, %v489, %v395
        %v506 = vsel %vm474, %v490, %v402
        %v507 = vsel %vm475, %v491, %v409
        %v508 = vsel %vm476, %v492, %v416
        %v509 = vsel %vm477, %v493, %v423
        %v510 = vsel %vm478, %v494, %v430
        %vm511 = vcmp.eq.s32.totalorder %v495, 0
        %vm512 = vcmp.eq.s32.totalorder %v496, 0
        %vm513 = vcmp.eq.s32.totalorder %v497, 0
        %vm514 = vcmp.eq.s32.totalorder %v498, 0
        %vm515 = vcmp.eq.s32.totalorder %v499, 0
        %vm516 = vcmp.eq.s32.totalorder %v500, 0
        %vm517 = vcmp.eq.s32.totalorder %v501, 0
        %vm518 = vcmp.eq.s32.totalorder %v502, 0
        %vm519 = vcmp.eq.s32.totalorder %v503, 0
        %vm520 = vcmp.eq.s32.totalorder %v504, 0
        %vm521 = vcmp.eq.s32.totalorder %v505, 0
        %vm522 = vcmp.eq.s32.totalorder %v506, 0
        %vm523 = vcmp.eq.s32.totalorder %v507, 0
        %vm524 = vcmp.eq.s32.totalorder %v508, 0
        %vm525 = vcmp.eq.s32.totalorder %v509, 0
        %vm526 = vcmp.eq.s32.totalorder %v510, 0
        %vm527 = vcmp.eq.s32.totalorder %v495, 15
        %vm528 = vcmp.eq.s32.totalorder %v496, 15
        %vm529 = vcmp.eq.s32.totalorder %v497, 15
        %vm530 = vcmp.eq.s32.totalorder %v498, 15
        %vm531 = vcmp.eq.s32.totalorder %v499, 15
        %vm532 = vcmp.eq.s32.totalorder %v500, 15
        %vm533 = vcmp.eq.s32.totalorder %v501, 15
        %vm534 = vcmp.eq.s32.totalorder %v502, 15
        %vm535 = vcmp.eq.s32.totalorder %v503, 15
        %vm536 = vcmp.eq.s32.totalorder %v504, 15
        %vm537 = vcmp.eq.s32.totalorder %v505, 15
        %vm538 = vcmp.eq.s32.totalorder %v506, 15
        %vm539 = vcmp.eq.s32.totalorder %v507, 15
        %vm540 = vcmp.eq.s32.totalorder %v508, 15
        %vm541 = vcmp.eq.s32.totalorder %v509, 15
        %vm542 = vcmp.eq.s32.totalorder %v510, 15
        %v543 = vld [vmem:[%s254] sm:$0xff]
        %v544 = vld [vmem:[%s254 + $0x8] sm:$0xff]
        %v545 = vld [vmem:[%s254 + $0x10] sm:$0xff]
        %v546 = vld [vmem:[%s254 + $0x18] sm:$0xff]
        %v547 = vld [vmem:[%s254 + $0x20] sm:$0xff]
        %v548 = vld [vmem:[%s254 + $0x28] sm:$0xff]
        %v549 = vld [vmem:[%s254 + $0x30] sm:$0xff]
        %v550 = vld [vmem:[%s254 + $0x38] sm:$0xff]
        %v551 = vld [vmem:[%s254 + $0x40] sm:$0xff]
        %v552 = vld [vmem:[%s254 + $0x48] sm:$0xff]
        %v553 = vld [vmem:[%s254 + $0x50] sm:$0xff]
        %v554 = vld [vmem:[%s254 + $0x58] sm:$0xff]
        %v555 = vld [vmem:[%s254 + $0x60] sm:$0xff]
        %v556 = vld [vmem:[%s254 + $0x68] sm:$0xff]
        %v557 = vld [vmem:[%s254 + $0x70] sm:$0xff]
        %v558 = vld [vmem:[%s254 + $0x78] sm:$0xff]
        %v559 = vrot.slane %v543, 7
        %v560 = vrot.slane %v544, 7
        %v561 = vrot.slane %v545, 7
        %v562 = vrot.slane %v546, 7
        %v563 = vrot.slane %v547, 7
        %v564 = vrot.slane %v548, 7
        %v565 = vrot.slane %v549, 7
        %v566 = vrot.slane %v550, 7
        %v567 = vrot.slane %v551, 7
        %v568 = vrot.slane %v552, 7
        %v569 = vrot.slane %v553, 7
        %v570 = vrot.slane %v554, 7
        %v571 = vrot.slane %v555, 7
        %v572 = vrot.slane %v556, 7
        %v573 = vrot.slane %v557, 7
        %v574 = vrot.slane %v558, 7
        %vm575 = vcmp.lt.s32.totalorder %v303, 1
        %v576 = vsel %vm575, %v573, %v574
        %v577 = vsel %vm575, %v572, %v573
        %v578 = vsel %vm575, %v571, %v572
        %v579 = vsel %vm575, %v570, %v571
        %v580 = vsel %vm575, %v569, %v570
        %v581 = vsel %vm575, %v568, %v569
        %v582 = vsel %vm575, %v567, %v568
        %v583 = vsel %vm575, %v566, %v567
        %v584 = vsel %vm575, %v565, %v566
        %v585 = vsel %vm575, %v564, %v565
        %v586 = vsel %vm575, %v563, %v564
        %v587 = vsel %vm575, %v562, %v563
        %v588 = vsel %vm575, %v561, %v562
        %v589 = vsel %vm575, %v560, %v561
        %v590 = vsel %vm575, %v559, %v560
        %v591 = vsel %vm575, %v574, %v559
        %v592 = vsel %vm511, 0.0, %v591
        %v593 = vsel %vm512, 0.0, %v590
        %v594 = vsel %vm513, 0.0, %v589
        %v595 = vsel %vm514, 0.0, %v588
        %v596 = vsel %vm515, 0.0, %v587
        %v597 = vsel %vm516, 0.0, %v586
        %v598 = vsel %vm517, 0.0, %v585
        %v599 = vsel %vm518, 0.0, %v584
        %v600 = vsel %vm519, 0.0, %v583
        %v601 = vsel %vm520, 0.0, %v582
        %v602 = vsel %vm521, 0.0, %v581
        %v603 = vsel %vm522, 0.0, %v580
        %v604 = vsel %vm523, 0.0, %v579
        %v605 = vsel %vm524, 0.0, %v578
        %v606 = vsel %vm525, 0.0, %v577
        %v607 = vsel %vm526, 0.0, %v576
        %v608 = vrot.slane %v543, 1
        %v609 = vrot.slane %v544, 1
        %v610 = vrot.slane %v545, 1
        %v611 = vrot.slane %v546, 1
        %v612 = vrot.slane %v547, 1
        %v613 = vrot.slane %v548, 1
        %v614 = vrot.slane %v549, 1
        %v615 = vrot.slane %v550, 1
        %v616 = vrot.slane %v551, 1
        %v617 = vrot.slane %v552, 1
        %v618 = vrot.slane %v553, 1
        %v619 = vrot.slane %v554, 1
        %v620 = vrot.slane %v555, 1
        %v621 = vrot.slane %v556, 1
        %v622 = vrot.slane %v557, 1
        %v623 = vrot.slane %v558, 1
        %vm624 = vcmp.lt.s32.totalorder %v303, 7
        %v625 = vsel %vm624, %v622, %v623
        %v626 = vsel %vm624, %v621, %v622
        %v627 = vsel %vm624, %v620, %v621
        %v628 = vsel %vm624, %v619, %v620
        %v629 = vsel %vm624, %v618, %v619
        %v630 = vsel %vm624, %v617, %v618
        %v631 = vsel %vm624, %v616, %v617
        %v632 = vsel %vm624, %v615, %v616
        %v633 = vsel %vm624, %v614, %v615
        %v634 = vsel %vm624, %v613, %v614
        %v635 = vsel %vm624, %v612, %v613
        %v636 = vsel %vm624, %v611, %v612
        %v637 = vsel %vm624, %v610, %v611
        %v638 = vsel %vm624, %v609, %v610
        %v639 = vsel %vm624, %v608, %v609
        %v640 = vsel %vm624, %v623, %v608
        %v641 = vsel %vm527, 0.0, %v639
        %v642 = vsel %vm528, 0.0, %v638
        %v643 = vsel %vm529, 0.0, %v637
        %v644 = vsel %vm530, 0.0, %v636
        %v645 = vsel %vm531, 0.0, %v635
        %v646 = vsel %vm532, 0.0, %v634
        %v647 = vsel %vm533, 0.0, %v633
        %v648 = vsel %vm534, 0.0, %v632
        %v649 = vsel %vm535, 0.0, %v631
        %v650 = vsel %vm536, 0.0, %v630
        %v651 = vsel %vm537, 0.0, %v629
        %v652 = vsel %vm538, 0.0, %v628
        %v653 = vsel %vm539, 0.0, %v627
        %v654 = vsel %vm540, 0.0, %v626
        %v655 = vsel %vm541, 0.0, %v625
        %v656 = vsel %vm542, 0.0, %v640
        %v657 = vpack.c.bf16 %v593, %v592
        %v658 = vpack.c.bf16 %v544, %v543
        %v659 = vpack.c.bf16 %v642, %v641
        %v660 = vpack.c.bf16 %v595, %v594
        %v661 = vpack.c.bf16 %v546, %v545
        %v662 = vpack.c.bf16 %v644, %v643
        %v663 = vpack.c.bf16 %v597, %v596
        %v664 = vpack.c.bf16 %v548, %v547
        %v665 = vpack.c.bf16 %v646, %v645
        %v666 = vpack.c.bf16 %v599, %v598
        %v667 = vpack.c.bf16 %v550, %v549
        %v668 = vpack.c.bf16 %v648, %v647
        %v669 = vpack.c.bf16 %v601, %v600
        %v670 = vpack.c.bf16 %v552, %v551
        %v671 = vpack.c.bf16 %v650, %v649
        %v672 = vpack.c.bf16 %v603, %v602
        %v673 = vpack.c.bf16 %v554, %v553
        %v674 = vpack.c.bf16 %v652, %v651
        %v675 = vpack.c.bf16 %v605, %v604
        %v676 = vpack.c.bf16 %v556, %v555
        %v677 = vpack.c.bf16 %v654, %v653
        %v678 = vpack.c.bf16 %v607, %v606
        %v679 = vpack.c.bf16 %v558, %v557
        %v680 = vpack.c.bf16 %v656, %v655
        %v681 = vld [vmem:[#allocation8] sm:$0xf]
        %v682 = vld [vmem:[#allocation8 + $0x4] sm:$0xf]
        %v683 = vld [vmem:[#allocation8 + $0x8] sm:$0xf]
        %v684 = vld [vmem:[#allocation8 + $0xc] sm:$0xf]
        %v685 = vld [vmem:[#allocation8 + $0x10] sm:$0xf]
        %v686 = vld [vmem:[#allocation8 + $0x14] sm:$0xf]
        %v687 = vld [vmem:[#allocation8 + $0x18] sm:$0xf]
        %v688 = vld [vmem:[#allocation8 + $0x1c] sm:$0xf]
        %v689 = vld [vmem:[#allocation8 + $0x20] sm:$0xf]
        %v690 = vld [vmem:[#allocation8 + $0x24] sm:$0xf]
        %v691 = vld [vmem:[#allocation8 + $0x28] sm:$0xf]
        %v692 = vld [vmem:[#allocation8 + $0x2c] sm:$0xf]
        %v693 = vld [vmem:[#allocation8 + $0x30] sm:$0xf]
        %v694 = vld [vmem:[#allocation8 + $0x34] sm:$0xf]
        %v695 = vld [vmem:[#allocation8 + $0x38] sm:$0xf]
        %v696 = vld [vmem:[#allocation8 + $0x3c] sm:$0xf]
        %v697 = vld [vmem:[#allocation8 + $0x40] sm:$0xf]
        %v698 = vld [vmem:[#allocation8 + $0x44] sm:$0xf]
        %v699 = vld [vmem:[#allocation8 + $0x48] sm:$0xf]
        %v700 = vld [vmem:[#allocation8 + $0x4c] sm:$0xf]
        %v701 = vld [vmem:[#allocation8 + $0x50] sm:$0xf]
        %v702 = vld [vmem:[#allocation8 + $0x54] sm:$0xf]
        %v703 = vld [vmem:[#allocation8 + $0x58] sm:$0xf]
        %v704 = vld [vmem:[#allocation8 + $0x5c] sm:$0xf]
        %v705 = vld [vmem:[#allocation8 + $0x60] sm:$0xf]
        %v706 = vld [vmem:[#allocation8 + $0x64] sm:$0xf]
        %v707 = vld [vmem:[#allocation8 + $0x68] sm:$0xf]
        %v708 = vld [vmem:[#allocation8 + $0x6c] sm:$0xf]
        %v709 = vld [vmem:[#allocation8 + $0x70] sm:$0xf]
        %v710 = vld [vmem:[#allocation8 + $0x74] sm:$0xf]
        %v711 = vld [vmem:[#allocation8 + $0x78] sm:$0xf]
        %v712 = vld [vmem:[#allocation8 + $0x7c] sm:$0xf]
        %v713 = vld [vmem:[#allocation8 + $0x80] sm:$0xf]
        %v714 = vld [vmem:[#allocation8 + $0x84] sm:$0xf]
        %v715 = vld [vmem:[#allocation8 + $0x88] sm:$0xf]
        %v716 = vld [vmem:[#allocation8 + $0x8c] sm:$0xf]
        %v717 = vld [vmem:[#allocation8 + $0x90] sm:$0xf]
        %v718 = vld [vmem:[#allocation8 + $0x94] sm:$0xf]
        %v719 = vld [vmem:[#allocation8 + $0x98] sm:$0xf]
        %v720 = vld [vmem:[#allocation8 + $0x9c] sm:$0xf]
        %v721 = vld [vmem:[#allocation8 + $0xa0] sm:$0xf]
        %v722 = vld [vmem:[#allocation8 + $0xa4] sm:$0xf]
        %v723 = vld [vmem:[#allocation8 + $0xa8] sm:$0xf]
        %v724 = vld [vmem:[#allocation8 + $0xac] sm:$0xf]
        %v725 = vld [vmem:[#allocation8 + $0xb0] sm:$0xf]
        %v726 = vld [vmem:[#allocation8 + $0xb4] sm:$0xf]
        %v727 = vld [vmem:[#allocation8 + $0xb8] sm:$0xf]
        %v728 = vld [vmem:[#allocation8 + $0xbc] sm:$0xf]
        %v729 = vld [vmem:[%s2] sm:$0x1]
        %v731 = vlaneseq
        %v732 = vshrl.u32 %v731, 7
        %v733 = vsub.s32 0, %v732
        %v734 = vrot.slane %v729, %v733
        %v784 = vunpack.c.l.b16 %v681
        %v785 = vunpack.c.l.b16 %v682
        %v786 = vunpack.c.l.b16 %v683
        %v787 = vunpack.c.l.b16 %v684
        %v788 = vunpack.c.l.b16 %v685
        %v789 = vunpack.c.l.b16 %v686
        %v790 = vunpack.c.l.b16 %v687
        %v791 = vunpack.c.l.b16 %v688
        %v792 = vunpack.c.l.b16 %v689
        %v793 = vunpack.c.l.b16 %v690
        %v794 = vunpack.c.l.b16 %v691
        %v795 = vunpack.c.l.b16 %v692
        %v796 = vunpack.c.l.b16 %v693
        %v797 = vunpack.c.l.b16 %v694
        %v798 = vunpack.c.l.b16 %v695
        %v799 = vunpack.c.l.b16 %v696
        %v800 = vunpack.c.l.b16 %v697
        %v801 = vunpack.c.l.b16 %v698
        %v802 = vunpack.c.l.b16 %v699
        %v803 = vunpack.c.l.b16 %v700
        %v804 = vunpack.c.l.b16 %v701
        %v805 = vunpack.c.l.b16 %v702
        %v806 = vunpack.c.l.b16 %v703
        %v807 = vunpack.c.l.b16 %v704
        %v808 = vunpack.c.l.b16 %v705
        %v809 = vunpack.c.l.b16 %v706
        %v810 = vunpack.c.l.b16 %v707
        %v811 = vunpack.c.l.b16 %v708
        %v812 = vunpack.c.l.b16 %v709
        %v813 = vunpack.c.l.b16 %v710
        %v814 = vunpack.c.l.b16 %v711
        %v815 = vunpack.c.l.b16 %v712
        %v816 = vunpack.c.l.b16 %v713
        %v817 = vunpack.c.l.b16 %v714
        %v818 = vunpack.c.l.b16 %v715
        %v819 = vunpack.c.l.b16 %v716
        %v820 = vunpack.c.l.b16 %v717
        %v821 = vunpack.c.l.b16 %v718
        %v822 = vunpack.c.l.b16 %v719
        %v823 = vunpack.c.l.b16 %v720
        %v824 = vunpack.c.l.b16 %v721
        %v825 = vunpack.c.l.b16 %v722
        %v826 = vunpack.c.l.b16 %v723
        %v827 = vunpack.c.l.b16 %v724
        %v828 = vunpack.c.l.b16 %v725
        %v829 = vunpack.c.l.b16 %v726
        %v830 = vunpack.c.l.b16 %v727
        %v831 = vunpack.c.l.b16 %v728
        %v832 = vpack.c.b16 %v785, %v784
        %v833 = vpack.c.b16 %v787, %v786
        %v834 = vpack.c.b16 %v789, %v788
        %v835 = vpack.c.b16 %v791, %v790
        %v836 = vpack.c.b16 %v793, %v792
        %v837 = vpack.c.b16 %v795, %v794
        %v838 = vpack.c.b16 %v797, %v796
        %v839 = vpack.c.b16 %v799, %v798
        %v840 = vpack.c.b16 %v801, %v800
        %v841 = vpack.c.b16 %v803, %v802
        %v842 = vpack.c.b16 %v805, %v804
        %v843 = vpack.c.b16 %v807, %v806
        %v844 = vpack.c.b16 %v809, %v808
        %v845 = vpack.c.b16 %v811, %v810
        %v846 = vpack.c.b16 %v813, %v812
        %v847 = vpack.c.b16 %v815, %v814
        %v848 = vpack.c.b16 %v817, %v816
        %v849 = vpack.c.b16 %v819, %v818
        %v850 = vpack.c.b16 %v821, %v820
        %v851 = vpack.c.b16 %v823, %v822
        %v852 = vpack.c.b16 %v825, %v824
        %v853 = vpack.c.b16 %v827, %v826
        %v854 = vpack.c.b16 %v829, %v828
        %v855 = vpack.c.b16 %v831, %v830
        %880 = vmatprep.subr.bf16.mxu0 0
        %881 = vmatpush1.bf16.msra.mxu0 %v832
        %882 = vmatprep.subr.bf16.mxu0 0
        %883 = vmatpush1.bf16.msra.mxu0 %v833
        %884 = vmatprep.subr.bf16.mxu0 0
        %885 = vmatpush1.bf16.msra.mxu0 %v834
        %886 = vmatprep.subr.bf16.mxu0 0
        %887 = vmatpush1.bf16.msra.mxu0 %v835
        %888 = vmatprep.subr.bf16.mxu0 0
        %889 = vmatpush1.bf16.msra.mxu0 %v836
        %890 = vmatprep.subr.bf16.mxu0 0
        %891 = vmatpush1.bf16.msra.mxu0 %v837
        %892 = vmatprep.subr.bf16.mxu0 0
        %893 = vmatpush1.bf16.msra.mxu0 %v838
        %894 = vmatprep.subr.bf16.mxu0 0
        %895 = vmatpush1.bf16.msra.mxu0 %v839
        %896 = vmatprep.subr.bf16.mxu0 0
        %897 = vmatpush1.bf16.msra.mxu0 %v840
        %898 = vmatprep.subr.bf16.mxu0 0
        %899 = vmatpush1.bf16.msra.mxu0 %v841
        %900 = vmatprep.subr.bf16.mxu0 0
        %901 = vmatpush1.bf16.msra.mxu0 %v842
        %902 = vmatprep.subr.bf16.mxu0 0
        %903 = vmatpush1.bf16.msra.mxu0 %v843
        %904 = vmatprep.subr.bf16.mxu0 0
        %905 = vmatpush1.bf16.msra.mxu0 %v844
        %906 = vmatprep.subr.bf16.mxu0 0
        %907 = vmatpush1.bf16.msra.mxu0 %v845
        %908 = vmatprep.subr.bf16.mxu0 0
        %909 = vmatpush1.bf16.msra.mxu0 %v846
        %910 = vmatprep.subr.bf16.mxu0 0
        %911 = vmatpush1.bf16.msra.mxu0 %v847
        %912 = vmatprep.mubr.bf16.mxu0 %v658
        %913 = vmatmul.mubr.bf16.gmra.mrb[0].mxu0 %v657
        %v914 = vpop.f32.mrb[0].mxu0
        %v915 = vadd.f32 %v734, %v914
        %v916 = vpop.f32.mrb[0].mxu0
        %v917 = vpop.f32.mrb[0].mxu0
        %v918 = vadd.f32 %v734, %v917
        %v919 = vpop.f32.mrb[0].mxu0
        %920 = vmatprep.mubr.bf16.mxu0 %v661
        %921 = vmatmul.mubr.bf16.gmra.mrb[0].mxu0 %v660
        %v922 = vpop.f32.mrb[0].mxu0
        %v923 = vadd.f32 %v734, %v922
        %v924 = vpop.f32.mrb[0].mxu0
        %v925 = vpop.f32.mrb[0].mxu0
        %v926 = vadd.f32 %v734, %v925
        %v927 = vpop.f32.mrb[0].mxu0
        %928 = vmatprep.mubr.bf16.mxu0 %v664
        %929 = vmatmul.mubr.bf16.gmra.mrb[0].mxu0 %v663
        %v930 = vpop.f32.mrb[0].mxu0
        %v931 = vadd.f32 %v734, %v930
        %v932 = vpop.f32.mrb[0].mxu0
        %v933 = vpop.f32.mrb[0].mxu0
        %v934 = vadd.f32 %v734, %v933
        %v935 = vpop.f32.mrb[0].mxu0
        %936 = vmatprep.mubr.bf16.mxu0 %v667
        %937 = vmatmul.mubr.bf16.gmra.mrb[0].mxu0 %v666
        %v938 = vpop.f32.mrb[0].mxu0
        %v939 = vadd.f32 %v734, %v938
        %v940 = vpop.f32.mrb[0].mxu0
        %v941 = vpop.f32.mrb[0].mxu0
        %v942 = vadd.f32 %v734, %v941
        %v943 = vpop.f32.mrb[0].mxu0
        %944 = vmatprep.mubr.bf16.mxu0 %v670
        %945 = vmatmul.mubr.bf16.gmra.mrb[0].mxu0 %v669
        %v946 = vpop.f32.mrb[0].mxu0
        %v947 = vadd.f32 %v734, %v946
        %v948 = vpop.f32.mrb[0].mxu0
        %v949 = vpop.f32.mrb[0].mxu0
        %v950 = vadd.f32 %v734, %v949
        %v951 = vpop.f32.mrb[0].mxu0
        %952 = vmatprep.mubr.bf16.mxu0 %v673
        %953 = vmatmul.mubr.bf16.gmra.mrb[0].mxu0 %v672
        %v954 = vpop.f32.mrb[0].mxu0
        %v955 = vadd.f32 %v734, %v954
        %v956 = vpop.f32.mrb[0].mxu0
        %v957 = vpop.f32.mrb[0].mxu0
        %v958 = vadd.f32 %v734, %v957
        %v959 = vpop.f32.mrb[0].mxu0
        %960 = vmatprep.mubr.bf16.mxu0 %v676
        %961 = vmatmul.mubr.bf16.gmra.mrb[0].mxu0 %v675
        %v962 = vpop.f32.mrb[0].mxu0
        %v963 = vadd.f32 %v734, %v962
        %v964 = vpop.f32.mrb[0].mxu0
        %v965 = vpop.f32.mrb[0].mxu0
        %v966 = vadd.f32 %v734, %v965
        %v967 = vpop.f32.mrb[0].mxu0
        %968 = vmatprep.mubr.bf16.mxu0 %v679
        %969 = vmatmul.mubr.bf16.gmra.mrb[0].mxu0 %v678
        %v970 = vpop.f32.mrb[0].mxu0
        %v971 = vadd.f32 %v734, %v970
        %v972 = vpop.f32.mrb[0].mxu0
        %v973 = vpop.f32.mrb[0].mxu0
        %v974 = vadd.f32 %v734, %v973
        %v975 = vpop.f32.mrb[0].mxu0
        %976 = vdwg.mxu0
        %977 = vmatprep.subr.bf16.mxu0 0
        %978 = vmatpush1.bf16.msra.mxu0 %v848
        %979 = vmatprep.subr.bf16.mxu0 0
        %980 = vmatpush1.bf16.msra.mxu0 %v849
        %981 = vmatprep.subr.bf16.mxu0 0
        %982 = vmatpush1.bf16.msra.mxu0 %v850
        %983 = vmatprep.subr.bf16.mxu0 0
        %984 = vmatpush1.bf16.msra.mxu0 %v851
        %985 = vmatprep.subr.bf16.mxu0 0
        %986 = vmatpush1.bf16.msra.mxu0 %v852
        %987 = vmatprep.subr.bf16.mxu0 0
        %988 = vmatpush1.bf16.msra.mxu0 %v853
        %989 = vmatprep.subr.bf16.mxu0 0
        %990 = vmatpush1.bf16.msra.mxu0 %v854
        %991 = vmatprep.subr.bf16.mxu0 0
        %992 = vmatpush1.bf16.msra.mxu0 %v855
        %993 = vmatprep.subr.bf16.mxu0 0
        %994 = vmatpush1.bf16.msra.mxu0 0
        %995 = vmatprep.subr.bf16.mxu0 0
        %996 = vmatpush1.bf16.msra.mxu0 0
        %997 = vmatprep.subr.bf16.mxu0 0
        %998 = vmatpush1.bf16.msra.mxu0 0
        %999 = vmatprep.subr.bf16.mxu0 0
        %1000 = vmatpush1.bf16.msra.mxu0 0
        %1001 = vmatprep.subr.bf16.mxu0 0
        %1002 = vmatpush1.bf16.msra.mxu0 0
        %1003 = vmatprep.subr.bf16.mxu0 0
        %1004 = vmatpush1.bf16.msra.mxu0 0
        %1005 = vmatprep.subr.bf16.mxu0 0
        %1006 = vmatpush1.bf16.msra.mxu0 0
        %1007 = vmatprep.subr.bf16.mxu0 0
        %1008 = vmatpush1.bf16.msra.mxu0 0
        %1009 = vmatprep.mubr.bf16.mxu0 0
        %1010 = vmatmul.mubr.bf16.gmra.mrb[0].mxu0 %v659
        %v1011 = vpop.f32.mrb[0].mxu0
        %v1012 = vadd.f32 %v915, %v1011
        %v1013 = vpop.f32.mrb[0].mxu0
        %v1014 = vpop.f32.mrb[0].mxu0
        %v1015 = vadd.f32 %v918, %v1014
        %v1016 = vpop.f32.mrb[0].mxu0
        %1017 = vmatprep.mubr.bf16.mxu0 0
        %1018 = vmatmul.mubr.bf16.gmra.mrb[0].mxu0 %v662
        %v1019 = vpop.f32.mrb[0].mxu0
        %v1020 = vadd.f32 %v923, %v1019
        %v1021 = vpop.f32.mrb[0].mxu0
        %v1022 = vpop.f32.mrb[0].mxu0
        %v1023 = vadd.f32 %v926, %v1022
        %v1024 = vpop.f32.mrb[0].mxu0
        %1025 = vmatprep.mubr.bf16.mxu0 0
        %1026 = vmatmul.mubr.bf16.gmra.mrb[0].mxu0 %v665
        %v1027 = vpop.f32.mrb[0].mxu0
        %v1028 = vadd.f32 %v931, %v1027
        %v1029 = vpop.f32.mrb[0].mxu0
        %v1030 = vpop.f32.mrb[0].mxu0
        %v1031 = vadd.f32 %v934, %v1030
        %v1032 = vpop.f32.mrb[0].mxu0
        %1033 = vmatprep.mubr.bf16.mxu0 0
        %1034 = vmatmul.mubr.bf16.gmra.mrb[0].mxu0 %v668
        %v1035 = vpop.f32.mrb[0].mxu0
        %v1036 = vadd.f32 %v939, %v1035
        %v1037 = vpop.f32.mrb[0].mxu0
        %v1038 = vpop.f32.mrb[0].mxu0
        %v1039 = vadd.f32 %v942, %v1038
        %v1040 = vpop.f32.mrb[0].mxu0
        %1041 = vmatprep.mubr.bf16.mxu0 0
        %1042 = vmatmul.mubr.bf16.gmra.mrb[0].mxu0 %v671
        %v1043 = vpop.f32.mrb[0].mxu0
        %v1044 = vadd.f32 %v947, %v1043
        %v1045 = vpop.f32.mrb[0].mxu0
        %v1046 = vpop.f32.mrb[0].mxu0
        %v1047 = vadd.f32 %v950, %v1046
        %v1048 = vpop.f32.mrb[0].mxu0
        %1049 = vmatprep.mubr.bf16.mxu0 0
        %1050 = vmatmul.mubr.bf16.gmra.mrb[0].mxu0 %v674
        %v1051 = vpop.f32.mrb[0].mxu0
        %v1052 = vadd.f32 %v955, %v1051
        %v1053 = vpop.f32.mrb[0].mxu0
        %v1054 = vpop.f32.mrb[0].mxu0
        %v1055 = vadd.f32 %v958, %v1054
        %v1056 = vpop.f32.mrb[0].mxu0
        %1057 = vmatprep.mubr.bf16.mxu0 0
        %1058 = vmatmul.mubr.bf16.gmra.mrb[0].mxu0 %v677
        %v1059 = vpop.f32.mrb[0].mxu0
        %v1060 = vadd.f32 %v963, %v1059
        %v1061 = vpop.f32.mrb[0].mxu0
        %v1062 = vpop.f32.mrb[0].mxu0
        %v1063 = vadd.f32 %v966, %v1062
        %v1064 = vpop.f32.mrb[0].mxu0
        %1065 = vmatprep.mubr.bf16.mxu0 0
        %1066 = vmatmul.mubr.bf16.gmra.mrb[0].mxu0 %v680
        %v1067 = vpop.f32.mrb[0].mxu0
        %v1068 = vadd.f32 %v971, %v1067
        %v1069 = vpop.f32.mrb[0].mxu0
        %v1070 = vpop.f32.mrb[0].mxu0
        %v1071 = vadd.f32 %v974, %v1070
        %v1072 = vpop.f32.mrb[0].mxu0
        %1073 = vdwg.mxu0
        %1074 = vst [vmem:[#allocation4] sm:$0xff] %v1012
        %1075 = vst [vmem:[#allocation4 + $0x8] sm:$0xff] %v1015
        %1076 = vst [vmem:[#allocation4 + $0x10] sm:$0xff] %v1020
        %1077 = vst [vmem:[#allocation4 + $0x18] sm:$0xff] %v1023
        %1078 = vst [vmem:[#allocation4 + $0x20] sm:$0xff] %v1028
        %1079 = vst [vmem:[#allocation4 + $0x28] sm:$0xff] %v1031
        %1080 = vst [vmem:[#allocation4 + $0x30] sm:$0xff] %v1036
        %1081 = vst [vmem:[#allocation4 + $0x38] sm:$0xff] %v1039
        %1082 = vst [vmem:[#allocation4 + $0x40] sm:$0xff] %v1044
        %1083 = vst [vmem:[#allocation4 + $0x48] sm:$0xff] %v1047
        %1084 = vst [vmem:[#allocation4 + $0x50] sm:$0xff] %v1052
        %1085 = vst [vmem:[#allocation4 + $0x58] sm:$0xff] %v1055
        %1086 = vst [vmem:[#allocation4 + $0x60] sm:$0xff] %v1060
        %1087 = vst [vmem:[#allocation4 + $0x68] sm:$0xff] %v1063
        %1088 = vst [vmem:[#allocation4 + $0x70] sm:$0xff] %v1068
        %1089 = vst [vmem:[#allocation4 + $0x78] sm:$0xff] %v1071
        %v1090 = vld [vmem:[#allocation2] sm:$0xff]
        %v1091 = vld [vmem:[#allocation2 + $0x8] sm:$0xff]
        %v1092 = vmul.f32 %v1090, 0.3
        %v1093 = vmul.f32 %v1091, 0.3
        %v1094 = vld [vmem:[#allocation4] sm:$0xff]
        %v1095 = vld [vmem:[#allocation4 + $0x8] sm:$0xff]
        %v1096 = vadd.f32 %v1092, %v1094
        %v1097 = vadd.f32 %v1093, %v1095
        %vm1098 = vcmp.ge.f32.partialorder %v1096, 0.5
        %vm1099 = vcmp.ge.f32.partialorder %v1097, 0.5
        %v1100 = vsel %vm1098, 0.0, %v1096
        %v1101 = vsel %vm1099, 0.0, %v1097
        %1102 = vst [vmem:[#allocation2] sm:$0xff] %v1100
        %1103 = vst [vmem:[#allocation2 + $0x8] sm:$0xff] %v1101
        %v1104 = vsel %vm1098, 1, 0
        %v1105 = vsel %vm1099, 1, 0
        %v1106 = vcvt.s32.f32 %v1104
        %v1107 = vcvt.s32.f32 %v1105
        %1108 = vst [vmem:[#allocation4] sm:$0xff] %v1106
        %1109 = vst [vmem:[#allocation4 + $0x8] sm:$0xff] %v1107
        %v1110 = vld [vmem:[#allocation2] sm:$0xff]
        %v1111 = vld [vmem:[#allocation2 + $0x8] sm:$0xff]
        %v1112 = vmul.f32 %v1110, 0.3
        %v1113 = vmul.f32 %v1111, 0.3
        %v1114 = vld [vmem:[#allocation4 + $0x10] sm:$0xff]
        %v1115 = vld [vmem:[#allocation4 + $0x18] sm:$0xff]
        %v1116 = vadd.f32 %v1112, %v1114
        %v1117 = vadd.f32 %v1113, %v1115
        %vm1118 = vcmp.ge.f32.partialorder %v1116, 0.5
        %vm1119 = vcmp.ge.f32.partialorder %v1117, 0.5
        %v1120 = vsel %vm1118, 0.0, %v1116
        %v1121 = vsel %vm1119, 0.0, %v1117
        %1122 = vst [vmem:[#allocation2] sm:$0xff] %v1120
        %1123 = vst [vmem:[#allocation2 + $0x8] sm:$0xff] %v1121
        %v1124 = vsel %vm1118, 1, 0
        %v1125 = vsel %vm1119, 1, 0
        %v1126 = vcvt.s32.f32 %v1124
        %v1127 = vcvt.s32.f32 %v1125
        %1128 = vst [vmem:[#allocation4 + $0x10] sm:$0xff] %v1126
        %1129 = vst [vmem:[#allocation4 + $0x18] sm:$0xff] %v1127
        %v1130 = vld [vmem:[#allocation2] sm:$0xff]
        %v1131 = vld [vmem:[#allocation2 + $0x8] sm:$0xff]
        %v1132 = vmul.f32 %v1130, 0.3
        %v1133 = vmul.f32 %v1131, 0.3
        %v1134 = vld [vmem:[#allocation4 + $0x20] sm:$0xff]
        %v1135 = vld [vmem:[#allocation4 + $0x28] sm:$0xff]
        %v1136 = vadd.f32 %v1132, %v1134
        %v1137 = vadd.f32 %v1133, %v1135
        %vm1138 = vcmp.ge.f32.partialorder %v1136, 0.5
        %vm1139 = vcmp.ge.f32.partialorder %v1137, 0.5
        %v1140 = vsel %vm1138, 0.0, %v1136
        %v1141 = vsel %vm1139, 0.0, %v1137
        %1142 = vst [vmem:[#allocation2] sm:$0xff] %v1140
        %1143 = vst [vmem:[#allocation2 + $0x8] sm:$0xff] %v1141
        %v1144 = vsel %vm1138, 1, 0
        %v1145 = vsel %vm1139, 1, 0
        %v1146 = vcvt.s32.f32 %v1144
        %v1147 = vcvt.s32.f32 %v1145
        %1148 = vst [vmem:[#allocation4 + $0x20] sm:$0xff] %v1146
        %1149 = vst [vmem:[#allocation4 + $0x28] sm:$0xff] %v1147
        %v1150 = vld [vmem:[#allocation2] sm:$0xff]
        %v1151 = vld [vmem:[#allocation2 + $0x8] sm:$0xff]
        %v1152 = vmul.f32 %v1150, 0.3
        %v1153 = vmul.f32 %v1151, 0.3
        %v1154 = vld [vmem:[#allocation4 + $0x30] sm:$0xff]
        %v1155 = vld [vmem:[#allocation4 + $0x38] sm:$0xff]
        %v1156 = vadd.f32 %v1152, %v1154
        %v1157 = vadd.f32 %v1153, %v1155
        %vm1158 = vcmp.ge.f32.partialorder %v1156, 0.5
        %vm1159 = vcmp.ge.f32.partialorder %v1157, 0.5
        %v1160 = vsel %vm1158, 0.0, %v1156
        %v1161 = vsel %vm1159, 0.0, %v1157
        %1162 = vst [vmem:[#allocation2] sm:$0xff] %v1160
        %1163 = vst [vmem:[#allocation2 + $0x8] sm:$0xff] %v1161
        %v1164 = vsel %vm1158, 1, 0
        %v1165 = vsel %vm1159, 1, 0
        %v1166 = vcvt.s32.f32 %v1164
        %v1167 = vcvt.s32.f32 %v1165
        %1168 = vst [vmem:[#allocation4 + $0x30] sm:$0xff] %v1166
        %1169 = vst [vmem:[#allocation4 + $0x38] sm:$0xff] %v1167
        %v1170 = vld [vmem:[#allocation2] sm:$0xff]
        %v1171 = vld [vmem:[#allocation2 + $0x8] sm:$0xff]
        %v1172 = vmul.f32 %v1170, 0.3
        %v1173 = vmul.f32 %v1171, 0.3
        %v1174 = vld [vmem:[#allocation4 + $0x40] sm:$0xff]
        %v1175 = vld [vmem:[#allocation4 + $0x48] sm:$0xff]
        %v1176 = vadd.f32 %v1172, %v1174
        %v1177 = vadd.f32 %v1173, %v1175
        %vm1178 = vcmp.ge.f32.partialorder %v1176, 0.5
        %vm1179 = vcmp.ge.f32.partialorder %v1177, 0.5
        %v1180 = vsel %vm1178, 0.0, %v1176
        %v1181 = vsel %vm1179, 0.0, %v1177
        %1182 = vst [vmem:[#allocation2] sm:$0xff] %v1180
        %1183 = vst [vmem:[#allocation2 + $0x8] sm:$0xff] %v1181
        %v1184 = vsel %vm1178, 1, 0
        %v1185 = vsel %vm1179, 1, 0
        %v1186 = vcvt.s32.f32 %v1184
        %v1187 = vcvt.s32.f32 %v1185
        %1188 = vst [vmem:[#allocation4 + $0x40] sm:$0xff] %v1186
        %1189 = vst [vmem:[#allocation4 + $0x48] sm:$0xff] %v1187
        %v1190 = vld [vmem:[#allocation2] sm:$0xff]
        %v1191 = vld [vmem:[#allocation2 + $0x8] sm:$0xff]
        %v1192 = vmul.f32 %v1190, 0.3
        %v1193 = vmul.f32 %v1191, 0.3
        %v1194 = vld [vmem:[#allocation4 + $0x50] sm:$0xff]
        %v1195 = vld [vmem:[#allocation4 + $0x58] sm:$0xff]
        %v1196 = vadd.f32 %v1192, %v1194
        %v1197 = vadd.f32 %v1193, %v1195
        %vm1198 = vcmp.ge.f32.partialorder %v1196, 0.5
        %vm1199 = vcmp.ge.f32.partialorder %v1197, 0.5
        %v1200 = vsel %vm1198, 0.0, %v1196
        %v1201 = vsel %vm1199, 0.0, %v1197
        %1202 = vst [vmem:[#allocation2] sm:$0xff] %v1200
        %1203 = vst [vmem:[#allocation2 + $0x8] sm:$0xff] %v1201
        %v1204 = vsel %vm1198, 1, 0
        %v1205 = vsel %vm1199, 1, 0
        %v1206 = vcvt.s32.f32 %v1204
        %v1207 = vcvt.s32.f32 %v1205
        %1208 = vst [vmem:[#allocation4 + $0x50] sm:$0xff] %v1206
        %1209 = vst [vmem:[#allocation4 + $0x58] sm:$0xff] %v1207
        %v1210 = vld [vmem:[#allocation2] sm:$0xff]
        %v1211 = vld [vmem:[#allocation2 + $0x8] sm:$0xff]
        %v1212 = vmul.f32 %v1210, 0.3
        %v1213 = vmul.f32 %v1211, 0.3
        %v1214 = vld [vmem:[#allocation4 + $0x60] sm:$0xff]
        %v1215 = vld [vmem:[#allocation4 + $0x68] sm:$0xff]
        %v1216 = vadd.f32 %v1212, %v1214
        %v1217 = vadd.f32 %v1213, %v1215
        %vm1218 = vcmp.ge.f32.partialorder %v1216, 0.5
        %vm1219 = vcmp.ge.f32.partialorder %v1217, 0.5
        %v1220 = vsel %vm1218, 0.0, %v1216
        %v1221 = vsel %vm1219, 0.0, %v1217
        %1222 = vst [vmem:[#allocation2] sm:$0xff] %v1220
        %1223 = vst [vmem:[#allocation2 + $0x8] sm:$0xff] %v1221
        %v1224 = vsel %vm1218, 1, 0
        %v1225 = vsel %vm1219, 1, 0
        %v1226 = vcvt.s32.f32 %v1224
        %v1227 = vcvt.s32.f32 %v1225
        %1228 = vst [vmem:[#allocation4 + $0x60] sm:$0xff] %v1226
        %1229 = vst [vmem:[#allocation4 + $0x68] sm:$0xff] %v1227
        %v1230 = vld [vmem:[#allocation2] sm:$0xff]
        %v1231 = vld [vmem:[#allocation2 + $0x8] sm:$0xff]
        %v1232 = vmul.f32 %v1230, 0.3
        %v1233 = vmul.f32 %v1231, 0.3
        %v1234 = vld [vmem:[#allocation4 + $0x70] sm:$0xff]
        %v1235 = vld [vmem:[#allocation4 + $0x78] sm:$0xff]
        %v1236 = vadd.f32 %v1232, %v1234
        %v1237 = vadd.f32 %v1233, %v1235
        %vm1238 = vcmp.ge.f32.partialorder %v1236, 0.5
        %vm1239 = vcmp.ge.f32.partialorder %v1237, 0.5
        %v1240 = vsel %vm1238, 0.0, %v1236
        %v1241 = vsel %vm1239, 0.0, %v1237
        %1242 = vst [vmem:[#allocation2] sm:$0xff] %v1240
        %1243 = vst [vmem:[#allocation2 + $0x8] sm:$0xff] %v1241
        %v1244 = vsel %vm1238, 1, 0
        %v1245 = vsel %vm1239, 1, 0
        %v1246 = vcvt.s32.f32 %v1244
        %v1247 = vcvt.s32.f32 %v1245
        %1248 = vst [vmem:[#allocation4 + $0x70] sm:$0xff] %v1246
        %1249 = vst [vmem:[#allocation4 + $0x78] sm:$0xff] %v1247
        %v1250 = vld [vmem:[#allocation4] sm:$0xff]
        %v1251 = vld [vmem:[#allocation4 + $0x8] sm:$0xff]
        %v1252 = vld [vmem:[#allocation4 + $0x10] sm:$0xff]
        %v1253 = vld [vmem:[#allocation4 + $0x18] sm:$0xff]
        %v1254 = vld [vmem:[#allocation4 + $0x20] sm:$0xff]
        %v1255 = vld [vmem:[#allocation4 + $0x28] sm:$0xff]
        %v1256 = vld [vmem:[#allocation4 + $0x30] sm:$0xff]
        %v1257 = vld [vmem:[#allocation4 + $0x38] sm:$0xff]
        %v1258 = vld [vmem:[#allocation4 + $0x40] sm:$0xff]
        %v1259 = vld [vmem:[#allocation4 + $0x48] sm:$0xff]
        %v1260 = vld [vmem:[#allocation4 + $0x50] sm:$0xff]
        %v1261 = vld [vmem:[#allocation4 + $0x58] sm:$0xff]
        %v1262 = vld [vmem:[#allocation4 + $0x60] sm:$0xff]
        %v1263 = vld [vmem:[#allocation4 + $0x68] sm:$0xff]
        %v1264 = vld [vmem:[#allocation4 + $0x70] sm:$0xff]
        %v1265 = vld [vmem:[#allocation4 + $0x78] sm:$0xff]
        %v1266 = vrot.slane %v1250, 7
        %v1267 = vrot.slane %v1251, 7
        %v1268 = vrot.slane %v1252, 7
        %v1269 = vrot.slane %v1253, 7
        %v1270 = vrot.slane %v1254, 7
        %v1271 = vrot.slane %v1255, 7
        %v1272 = vrot.slane %v1256, 7
        %v1273 = vrot.slane %v1257, 7
        %v1274 = vrot.slane %v1258, 7
        %v1275 = vrot.slane %v1259, 7
        %v1276 = vrot.slane %v1260, 7
        %v1277 = vrot.slane %v1261, 7
        %v1278 = vrot.slane %v1262, 7
        %v1279 = vrot.slane %v1263, 7
        %v1280 = vrot.slane %v1264, 7
        %v1281 = vrot.slane %v1265, 7
        %v1282 = vsel %vm575, %v1280, %v1281
        %v1283 = vsel %vm575, %v1279, %v1280
        %v1284 = vsel %vm575, %v1278, %v1279
        %v1285 = vsel %vm575, %v1277, %v1278
        %v1286 = vsel %vm575, %v1276, %v1277
        %v1287 = vsel %vm575, %v1275, %v1276
        %v1288 = vsel %vm575, %v1274, %v1275
        %v1289 = vsel %vm575, %v1273, %v1274
        %v1290 = vsel %vm575, %v1272, %v1273
        %v1291 = vsel %vm575, %v1271, %v1272
        %v1292 = vsel %vm575, %v1270, %v1271
        %v1293 = vsel %vm575, %v1269, %v1270
        %v1294 = vsel %vm575, %v1268, %v1269
        %v1295 = vsel %vm575, %v1267, %v1268
        %v1296 = vsel %vm575, %v1266, %v1267
        %v1297 = vsel %vm575, %v1281, %v1266
        %v1298 = vsel %vm511, 0.0, %v1297
        %v1299 = vsel %vm512, 0.0, %v1296
        %v1300 = vsel %vm513, 0.0, %v1295
        %v1301 = vsel %vm514, 0.0, %v1294
        %v1302 = vsel %vm515, 0.0, %v1293
        %v1303 = vsel %vm516, 0.0, %v1292
        %v1304 = vsel %vm517, 0.0, %v1291
        %v1305 = vsel %vm518, 0.0, %v1290
        %v1306 = vsel %vm519, 0.0, %v1289
        %v1307 = vsel %vm520, 0.0, %v1288
        %v1308 = vsel %vm521, 0.0, %v1287
        %v1309 = vsel %vm522, 0.0, %v1286
        %v1310 = vsel %vm523, 0.0, %v1285
        %v1311 = vsel %vm524, 0.0, %v1284
        %v1312 = vsel %vm525, 0.0, %v1283
        %v1313 = vsel %vm526, 0.0, %v1282
        %v1314 = vrot.slane %v1250, 1
        %v1315 = vrot.slane %v1251, 1
        %v1316 = vrot.slane %v1252, 1
        %v1317 = vrot.slane %v1253, 1
        %v1318 = vrot.slane %v1254, 1
        %v1319 = vrot.slane %v1255, 1
        %v1320 = vrot.slane %v1256, 1
        %v1321 = vrot.slane %v1257, 1
        %v1322 = vrot.slane %v1258, 1
        %v1323 = vrot.slane %v1259, 1
        %v1324 = vrot.slane %v1260, 1
        %v1325 = vrot.slane %v1261, 1
        %v1326 = vrot.slane %v1262, 1
        %v1327 = vrot.slane %v1263, 1
        %v1328 = vrot.slane %v1264, 1
        %v1329 = vrot.slane %v1265, 1
        %v1330 = vsel %vm624, %v1328, %v1329
        %v1331 = vsel %vm624, %v1327, %v1328
        %v1332 = vsel %vm624, %v1326, %v1327
        %v1333 = vsel %vm624, %v1325, %v1326
        %v1334 = vsel %vm624, %v1324, %v1325
        %v1335 = vsel %vm624, %v1323, %v1324
        %v1336 = vsel %vm624, %v1322, %v1323
        %v1337 = vsel %vm624, %v1321, %v1322
        %v1338 = vsel %vm624, %v1320, %v1321
        %v1339 = vsel %vm624, %v1319, %v1320
        %v1340 = vsel %vm624, %v1318, %v1319
        %v1341 = vsel %vm624, %v1317, %v1318
        %v1342 = vsel %vm624, %v1316, %v1317
        %v1343 = vsel %vm624, %v1315, %v1316
        %v1344 = vsel %vm624, %v1314, %v1315
        %v1345 = vsel %vm624, %v1329, %v1314
        %v1346 = vsel %vm527, 0.0, %v1344
        %v1347 = vsel %vm528, 0.0, %v1343
        %v1348 = vsel %vm529, 0.0, %v1342
        %v1349 = vsel %vm530, 0.0, %v1341
        %v1350 = vsel %vm531, 0.0, %v1340
        %v1351 = vsel %vm532, 0.0, %v1339
        %v1352 = vsel %vm533, 0.0, %v1338
        %v1353 = vsel %vm534, 0.0, %v1337
        %v1354 = vsel %vm535, 0.0, %v1336
        %v1355 = vsel %vm536, 0.0, %v1335
        %v1356 = vsel %vm537, 0.0, %v1334
        %v1357 = vsel %vm538, 0.0, %v1333
        %v1358 = vsel %vm539, 0.0, %v1332
        %v1359 = vsel %vm540, 0.0, %v1331
        %v1360 = vsel %vm541, 0.0, %v1330
        %v1361 = vsel %vm542, 0.0, %v1345
        %v1362 = vpack.c.bf16 %v1299, %v1298
        %v1363 = vpack.c.bf16 %v1251, %v1250
        %v1364 = vpack.c.bf16 %v1347, %v1346
        %v1365 = vpack.c.bf16 %v1301, %v1300
        %v1366 = vpack.c.bf16 %v1253, %v1252
        %v1367 = vpack.c.bf16 %v1349, %v1348
        %v1368 = vpack.c.bf16 %v1303, %v1302
        %v1369 = vpack.c.bf16 %v1255, %v1254
        %v1370 = vpack.c.bf16 %v1351, %v1350
        %v1371 = vpack.c.bf16 %v1305, %v1304
        %v1372 = vpack.c.bf16 %v1257, %v1256
        %v1373 = vpack.c.bf16 %v1353, %v1352
        %v1374 = vpack.c.bf16 %v1307, %v1306
        %v1375 = vpack.c.bf16 %v1259, %v1258
        %v1376 = vpack.c.bf16 %v1355, %v1354
        %v1377 = vpack.c.bf16 %v1309, %v1308
        %v1378 = vpack.c.bf16 %v1261, %v1260
        %v1379 = vpack.c.bf16 %v1357, %v1356
        %v1380 = vpack.c.bf16 %v1311, %v1310
        %v1381 = vpack.c.bf16 %v1263, %v1262
        %v1382 = vpack.c.bf16 %v1359, %v1358
        %v1383 = vpack.c.bf16 %v1313, %v1312
        %v1384 = vpack.c.bf16 %v1265, %v1264
        %v1385 = vpack.c.bf16 %v1361, %v1360
        %v1386 = vld [vmem:[#allocation10] sm:$0xf]
        %v1387 = vld [vmem:[#allocation10 + $0x4] sm:$0xf]
        %v1388 = vld [vmem:[#allocation10 + $0x8] sm:$0xf]
        %v1389 = vld [vmem:[#allocation10 + $0xc] sm:$0xf]
        %v1390 = vld [vmem:[#allocation10 + $0x10] sm:$0xf]
        %v1391 = vld [vmem:[#allocation10 + $0x14] sm:$0xf]
        %v1392 = vld [vmem:[#allocation10 + $0x18] sm:$0xf]
        %v1393 = vld [vmem:[#allocation10 + $0x1c] sm:$0xf]
        %v1394 = vld [vmem:[#allocation10 + $0x20] sm:$0xf]
        %v1395 = vld [vmem:[#allocation10 + $0x24] sm:$0xf]
        %v1396 = vld [vmem:[#allocation10 + $0x28] sm:$0xf]
        %v1397 = vld [vmem:[#allocation10 + $0x2c] sm:$0xf]
        %v1398 = vld [vmem:[#allocation10 + $0x30] sm:$0xf]
        %v1399 = vld [vmem:[#allocation10 + $0x34] sm:$0xf]
        %v1400 = vld [vmem:[#allocation10 + $0x38] sm:$0xf]
        %v1401 = vld [vmem:[#allocation10 + $0x3c] sm:$0xf]
        %v1402 = vld [vmem:[#allocation10 + $0x40] sm:$0xf]
        %v1403 = vld [vmem:[#allocation10 + $0x44] sm:$0xf]
        %v1404 = vld [vmem:[#allocation10 + $0x48] sm:$0xf]
        %v1405 = vld [vmem:[#allocation10 + $0x4c] sm:$0xf]
        %v1406 = vld [vmem:[#allocation10 + $0x50] sm:$0xf]
        %v1407 = vld [vmem:[#allocation10 + $0x54] sm:$0xf]
        %v1408 = vld [vmem:[#allocation10 + $0x58] sm:$0xf]
        %v1409 = vld [vmem:[#allocation10 + $0x5c] sm:$0xf]
        %v1410 = vld [vmem:[#allocation10 + $0x60] sm:$0xf]
        %v1411 = vld [vmem:[#allocation10 + $0x64] sm:$0xf]
        %v1412 = vld [vmem:[#allocation10 + $0x68] sm:$0xf]
        %v1413 = vld [vmem:[#allocation10 + $0x6c] sm:$0xf]
        %v1414 = vld [vmem:[#allocation10 + $0x70] sm:$0xf]
        %v1415 = vld [vmem:[#allocation10 + $0x74] sm:$0xf]
        %v1416 = vld [vmem:[#allocation10 + $0x78] sm:$0xf]
        %v1417 = vld [vmem:[#allocation10 + $0x7c] sm:$0xf]
        %v1418 = vld [vmem:[#allocation10 + $0x80] sm:$0xf]
        %v1419 = vld [vmem:[#allocation10 + $0x84] sm:$0xf]
        %v1420 = vld [vmem:[#allocation10 + $0x88] sm:$0xf]
        %v1421 = vld [vmem:[#allocation10 + $0x8c] sm:$0xf]
        %v1422 = vld [vmem:[#allocation10 + $0x90] sm:$0xf]
        %v1423 = vld [vmem:[#allocation10 + $0x94] sm:$0xf]
        %v1424 = vld [vmem:[#allocation10 + $0x98] sm:$0xf]
        %v1425 = vld [vmem:[#allocation10 + $0x9c] sm:$0xf]
        %v1426 = vld [vmem:[#allocation10 + $0xa0] sm:$0xf]
        %v1427 = vld [vmem:[#allocation10 + $0xa4] sm:$0xf]
        %v1428 = vld [vmem:[#allocation10 + $0xa8] sm:$0xf]
        %v1429 = vld [vmem:[#allocation10 + $0xac] sm:$0xf]
        %v1430 = vld [vmem:[#allocation10 + $0xb0] sm:$0xf]
        %v1431 = vld [vmem:[#allocation10 + $0xb4] sm:$0xf]
        %v1432 = vld [vmem:[#allocation10 + $0xb8] sm:$0xf]
        %v1433 = vld [vmem:[#allocation10 + $0xbc] sm:$0xf]
        %v1434 = vld [vmem:[%s4] sm:$0x1]
        %v1436 = vlaneseq
        %v1437 = vshrl.u32 %v1436, 7
        %v1438 = vsub.s32 0, %v1437
        %v1439 = vrot.slane %v1434, %v1438
        %v1489 = vunpack.c.l.b16 %v1386
        %v1490 = vunpack.c.l.b16 %v1387
        %v1491 = vunpack.c.l.b16 %v1388
        %v1492 = vunpack.c.l.b16 %v1389
        %v1493 = vunpack.c.l.b16 %v1390
        %v1494 = vunpack.c.l.b16 %v1391
        %v1495 = vunpack.c.l.b16 %v1392
        %v1496 = vunpack.c.l.b16 %v1393
        %v1497 = vunpack.c.l.b16 %v1394
        %v1498 = vunpack.c.l.b16 %v1395
        %v1499 = vunpack.c.l.b16 %v1396
        %v1500 = vunpack.c.l.b16 %v1397
        %v1501 = vunpack.c.l.b16 %v1398
        %v1502 = vunpack.c.l.b16 %v1399
        %v1503 = vunpack.c.l.b16 %v1400
        %v1504 = vunpack.c.l.b16 %v1401
        %v1505 = vunpack.c.l.b16 %v1402
        %v1506 = vunpack.c.l.b16 %v1403
        %v1507 = vunpack.c.l.b16 %v1404
        %v1508 = vunpack.c.l.b16 %v1405
        %v1509 = vunpack.c.l.b16 %v1406
        %v1510 = vunpack.c.l.b16 %v1407
        %v1511 = vunpack.c.l.b16 %v1408
        %v1512 = vunpack.c.l.b16 %v1409
        %v1513 = vunpack.c.l.b16 %v1410
        %v1514 = vunpack.c.l.b16 %v1411
        %v1515 = vunpack.c.l.b16 %v1412
        %v1516 = vunpack.c.l.b16 %v1413
        %v1517 = vunpack.c.l.b16 %v1414
        %v1518 = vunpack.c.l.b16 %v1415
        %v1519 = vunpack.c.l.b16 %v1416
        %v1520 = vunpack.c.l.b16 %v1417
        %v1521 = vunpack.c.l.b16 %v1418
        %v1522 = vunpack.c.l.b16 %v1419
        %v1523 = vunpack.c.l.b16 %v1420
        %v1524 = vunpack.c.l.b16 %v1421
        %v1525 = vunpack.c.l.b16 %v1422
        %v1526 = vunpack.c.l.b16 %v1423
        %v1527 = vunpack.c.l.b16 %v1424
        %v1528 = vunpack.c.l.b16 %v1425
        %v1529 = vunpack.c.l.b16 %v1426
        %v1530 = vunpack.c.l.b16 %v1427
        %v1531 = vunpack.c.l.b16 %v1428
        %v1532 = vunpack.c.l.b16 %v1429
        %v1533 = vunpack.c.l.b16 %v1430
        %v1534 = vunpack.c.l.b16 %v1431
        %v1535 = vunpack.c.l.b16 %v1432
        %v1536 = vunpack.c.l.b16 %v1433
        %v1537 = vpack.c.b16 %v1490, %v1489
        %v1538 = vpack.c.b16 %v1492, %v1491
        %v1539 = vpack.c.b16 %v1494, %v1493
        %v1540 = vpack.c.b16 %v1496, %v1495
        %v1541 = vpack.c.b16 %v1498, %v1497
        %v1542 = vpack.c.b16 %v1500, %v1499
        %v1543 = vpack.c.b16 %v1502, %v1501
        %v1544 = vpack.c.b16 %v1504, %v1503
        %v1545 = vpack.c.b16 %v1506, %v1505
        %v1546 = vpack.c.b16 %v1508, %v1507
        %v1547 = vpack.c.b16 %v1510, %v1509
        %v1548 = vpack.c.b16 %v1512, %v1511
        %v1549 = vpack.c.b16 %v1514, %v1513
        %v1550 = vpack.c.b16 %v1516, %v1515
        %v1551 = vpack.c.b16 %v1518, %v1517
        %v1552 = vpack.c.b16 %v1520, %v1519
        %v1553 = vpack.c.b16 %v1522, %v1521
        %v1554 = vpack.c.b16 %v1524, %v1523
        %v1555 = vpack.c.b16 %v1526, %v1525
        %v1556 = vpack.c.b16 %v1528, %v1527
        %v1557 = vpack.c.b16 %v1530, %v1529
        %v1558 = vpack.c.b16 %v1532, %v1531
        %v1559 = vpack.c.b16 %v1534, %v1533
        %v1560 = vpack.c.b16 %v1536, %v1535
        %1585 = vmatprep.subr.bf16.mxu0 0
        %1586 = vmatpush1.bf16.msra.mxu0 %v1537
        %1587 = vmatprep.subr.bf16.mxu0 0
        %1588 = vmatpush1.bf16.msra.mxu0 %v1538
        %1589 = vmatprep.subr.bf16.mxu0 0
        %1590 = vmatpush1.bf16.msra.mxu0 %v1539
        %1591 = vmatprep.subr.bf16.mxu0 0
        %1592 = vmatpush1.bf16.msra.mxu0 %v1540
        %1593 = vmatprep.subr.bf16.mxu0 0
        %1594 = vmatpush1.bf16.msra.mxu0 %v1541
        %1595 = vmatprep.subr.bf16.mxu0 0
        %1596 = vmatpush1.bf16.msra.mxu0 %v1542
        %1597 = vmatprep.subr.bf16.mxu0 0
        %1598 = vmatpush1.bf16.msra.mxu0 %v1543
        %1599 = vmatprep.subr.bf16.mxu0 0
        %1600 = vmatpush1.bf16.msra.mxu0 %v1544
        %1601 = vmatprep.subr.bf16.mxu0 0
        %1602 = vmatpush1.bf16.msra.mxu0 %v1545
        %1603 = vmatprep.subr.bf16.mxu0 0
        %1604 = vmatpush1.bf16.msra.mxu0 %v1546
        %1605 = vmatprep.subr.bf16.mxu0 0
        %1606 = vmatpush1.bf16.msra.mxu0 %v1547
        %1607 = vmatprep.subr.bf16.mxu0 0
        %1608 = vmatpush1.bf16.msra.mxu0 %v1548
        %1609 = vmatprep.subr.bf16.mxu0 0
        %1610 = vmatpush1.bf16.msra.mxu0 %v1549
        %1611 = vmatprep.subr.bf16.mxu0 0
        %1612 = vmatpush1.bf16.msra.mxu0 %v1550
        %1613 = vmatprep.subr.bf16.mxu0 0
        %1614 = vmatpush1.bf16.msra.mxu0 %v1551
        %1615 = vmatprep.subr.bf16.mxu0 0
        %1616 = vmatpush1.bf16.msra.mxu0 %v1552
        %1617 = vmatprep.mubr.bf16.mxu0 %v1363
        %1618 = vmatmul.mubr.bf16.gmra.mrb[0].mxu0 %v1362
        %v1619 = vpop.f32.mrb[0].mxu0
        %v1620 = vadd.f32 %v1439, %v1619
        %v1621 = vpop.f32.mrb[0].mxu0
        %v1622 = vpop.f32.mrb[0].mxu0
        %v1623 = vadd.f32 %v1439, %v1622
        %v1624 = vpop.f32.mrb[0].mxu0
        %1625 = vmatprep.mubr.bf16.mxu0 %v1366
        %1626 = vmatmul.mubr.bf16.gmra.mrb[0].mxu0 %v1365
        %v1627 = vpop.f32.mrb[0].mxu0
        %v1628 = vadd.f32 %v1439, %v1627
        %v1629 = vpop.f32.mrb[0].mxu0
        %v1630 = vpop.f32.mrb[0].mxu0
        %v1631 = vadd.f32 %v1439, %v1630
        %v1632 = vpop.f32.mrb[0].mxu0
        %1633 = vmatprep.mubr.bf16.mxu0 %v1369
        %1634 = vmatmul.mubr.bf16.gmra.mrb[0].mxu0 %v1368
        %v1635 = vpop.f32.mrb[0].mxu0
        %v1636 = vadd.f32 %v1439, %v1635
        %v1637 = vpop.f32.mrb[0].mxu0
        %v1638 = vpop.f32.mrb[0].mxu0
        %v1639 = vadd.f32 %v1439, %v1638
        %v1640 = vpop.f32.mrb[0].mxu0
        %1641 = vmatprep.mubr.bf16.mxu0 %v1372
        %1642 = vmatmul.mubr.bf16.gmra.mrb[0].mxu0 %v1371
        %v1643 = vpop.f32.mrb[0].mxu0
        %v1644 = vadd.f32 %v1439, %v1643
        %v1645 = vpop.f32.mrb[0].mxu0
        %v1646 = vpop.f32.mrb[0].mxu0
        %v1647 = vadd.f32 %v1439, %v1646
        %v1648 = vpop.f32.mrb[0].mxu0
        %1649 = vmatprep.mubr.bf16.mxu0 %v1375
        %1650 = vmatmul.mubr.bf16.gmra.mrb[0].mxu0 %v1374
        %v1651 = vpop.f32.mrb[0].mxu0
        %v1652 = vadd.f32 %v1439, %v1651
        %v1653 = vpop.f32.mrb[0].mxu0
        %v1654 = vpop.f32.mrb[0].mxu0
        %v1655 = vadd.f32 %v1439, %v1654
        %v1656 = vpop.f32.mrb[0].mxu0
        %1657 = vmatprep.mubr.bf16.mxu0 %v1378
        %1658 = vmatmul.mubr.bf16.gmra.mrb[0].mxu0 %v1377
        %v1659 = vpop.f32.mrb[0].mxu0
        %v1660 = vadd.f32 %v1439, %v1659
        %v1661 = vpop.f32.mrb[0].mxu0
        %v1662 = vpop.f32.mrb[0].mxu0
        %v1663 = vadd.f32 %v1439, %v1662
        %v1664 = vpop.f32.mrb[0].mxu0
        %1665 = vmatprep.mubr.bf16.mxu0 %v1381
        %1666 = vmatmul.mubr.bf16.gmra.mrb[0].mxu0 %v1380
        %v1667 = vpop.f32.mrb[0].mxu0
        %v1668 = vadd.f32 %v1439, %v1667
        %v1669 = vpop.f32.mrb[0].mxu0
        %v1670 = vpop.f32.mrb[0].mxu0
        %v1671 = vadd.f32 %v1439, %v1670
        %v1672 = vpop.f32.mrb[0].mxu0
        %1673 = vmatprep.mubr.bf16.mxu0 %v1384
        %1674 = vmatmul.mubr.bf16.gmra.mrb[0].mxu0 %v1383
        %v1675 = vpop.f32.mrb[0].mxu0
        %v1676 = vadd.f32 %v1439, %v1675
        %v1677 = vpop.f32.mrb[0].mxu0
        %v1678 = vpop.f32.mrb[0].mxu0
        %v1679 = vadd.f32 %v1439, %v1678
        %v1680 = vpop.f32.mrb[0].mxu0
        %1681 = vdwg.mxu0
        %1682 = vmatprep.subr.bf16.mxu0 0
        %1683 = vmatpush1.bf16.msra.mxu0 %v1553
        %1684 = vmatprep.subr.bf16.mxu0 0
        %1685 = vmatpush1.bf16.msra.mxu0 %v1554
        %1686 = vmatprep.subr.bf16.mxu0 0
        %1687 = vmatpush1.bf16.msra.mxu0 %v1555
        %1688 = vmatprep.subr.bf16.mxu0 0
        %1689 = vmatpush1.bf16.msra.mxu0 %v1556
        %1690 = vmatprep.subr.bf16.mxu0 0
        %1691 = vmatpush1.bf16.msra.mxu0 %v1557
        %1692 = vmatprep.subr.bf16.mxu0 0
        %1693 = vmatpush1.bf16.msra.mxu0 %v1558
        %1694 = vmatprep.subr.bf16.mxu0 0
        %1695 = vmatpush1.bf16.msra.mxu0 %v1559
        %1696 = vmatprep.subr.bf16.mxu0 0
        %1697 = vmatpush1.bf16.msra.mxu0 %v1560
        %1698 = vmatprep.subr.bf16.mxu0 0
        %1699 = vmatpush1.bf16.msra.mxu0 0
        %1700 = vmatprep.subr.bf16.mxu0 0
        %1701 = vmatpush1.bf16.msra.mxu0 0
        %1702 = vmatprep.subr.bf16.mxu0 0
        %1703 = vmatpush1.bf16.msra.mxu0 0
        %1704 = vmatprep.subr.bf16.mxu0 0
        %1705 = vmatpush1.bf16.msra.mxu0 0
        %1706 = vmatprep.subr.bf16.mxu0 0
        %1707 = vmatpush1.bf16.msra.mxu0 0
        %1708 = vmatprep.subr.bf16.mxu0 0
        %1709 = vmatpush1.bf16.msra.mxu0 0
        %1710 = vmatprep.subr.bf16.mxu0 0
        %1711 = vmatpush1.bf16.msra.mxu0 0
        %1712 = vmatprep.subr.bf16.mxu0 0
        %1713 = vmatpush1.bf16.msra.mxu0 0
        %1714 = vmatprep.mubr.bf16.mxu0 0
        %1715 = vmatmul.mubr.bf16.gmra.mrb[0].mxu0 %v1364
        %v1716 = vpop.f32.mrb[0].mxu0
        %v1717 = vadd.f32 %v1620, %v1716
        %v1718 = vpop.f32.mrb[0].mxu0
        %v1719 = vpop.f32.mrb[0].mxu0
        %v1720 = vadd.f32 %v1623, %v1719
        %v1721 = vpop.f32.mrb[0].mxu0
        %1722 = vmatprep.mubr.bf16.mxu0 0
        %1723 = vmatmul.mubr.bf16.gmra.mrb[0].mxu0 %v1367
        %v1724 = vpop.f32.mrb[0].mxu0
        %v1725 = vadd.f32 %v1628, %v1724
        %v1726 = vpop.f32.mrb[0].mxu0
        %v1727 = vpop.f32.mrb[0].mxu0
        %v1728 = vadd.f32 %v1631, %v1727
        %v1729 = vpop.f32.mrb[0].mxu0
        %1730 = vmatprep.mubr.bf16.mxu0 0
        %1731 = vmatmul.mubr.bf16.gmra.mrb[0].mxu0 %v1370
        %v1732 = vpop.f32.mrb[0].mxu0
        %v1733 = vadd.f32 %v1636, %v1732
        %v1734 = vpop.f32.mrb[0].mxu0
        %v1735 = vpop.f32.mrb[0].mxu0
        %v1736 = vadd.f32 %v1639, %v1735
        %v1737 = vpop.f32.mrb[0].mxu0
        %1738 = vmatprep.mubr.bf16.mxu0 0
        %1739 = vmatmul.mubr.bf16.gmra.mrb[0].mxu0 %v1373
        %v1740 = vpop.f32.mrb[0].mxu0
        %v1741 = vadd.f32 %v1644, %v1740
        %v1742 = vpop.f32.mrb[0].mxu0
        %v1743 = vpop.f32.mrb[0].mxu0
        %v1744 = vadd.f32 %v1647, %v1743
        %v1745 = vpop.f32.mrb[0].mxu0
        %1746 = vmatprep.mubr.bf16.mxu0 0
        %1747 = vmatmul.mubr.bf16.gmra.mrb[0].mxu0 %v1376
        %v1748 = vpop.f32.mrb[0].mxu0
        %v1749 = vadd.f32 %v1652, %v1748
        %v1750 = vpop.f32.mrb[0].mxu0
        %v1751 = vpop.f32.mrb[0].mxu0
        %v1752 = vadd.f32 %v1655, %v1751
        %v1753 = vpop.f32.mrb[0].mxu0
        %1754 = vmatprep.mubr.bf16.mxu0 0
        %1755 = vmatmul.mubr.bf16.gmra.mrb[0].mxu0 %v1379
        %v1756 = vpop.f32.mrb[0].mxu0
        %v1757 = vadd.f32 %v1660, %v1756
        %v1758 = vpop.f32.mrb[0].mxu0
        %v1759 = vpop.f32.mrb[0].mxu0
        %v1760 = vadd.f32 %v1663, %v1759
        %v1761 = vpop.f32.mrb[0].mxu0
        %1762 = vmatprep.mubr.bf16.mxu0 0
        %1763 = vmatmul.mubr.bf16.gmra.mrb[0].mxu0 %v1382
        %v1764 = vpop.f32.mrb[0].mxu0
        %v1765 = vadd.f32 %v1668, %v1764
        %v1766 = vpop.f32.mrb[0].mxu0
        %v1767 = vpop.f32.mrb[0].mxu0
        %v1768 = vadd.f32 %v1671, %v1767
        %v1769 = vpop.f32.mrb[0].mxu0
        %1770 = vmatprep.mubr.bf16.mxu0 0
        %1771 = vmatmul.mubr.bf16.gmra.mrb[0].mxu0 %v1385
        %v1772 = vpop.f32.mrb[0].mxu0
        %v1773 = vadd.f32 %v1676, %v1772
        %v1774 = vpop.f32.mrb[0].mxu0
        %v1775 = vpop.f32.mrb[0].mxu0
        %v1776 = vadd.f32 %v1679, %v1775
        %v1777 = vpop.f32.mrb[0].mxu0
        %1778 = vdwg.mxu0
        %1779 = vst [vmem:[#allocation4] sm:$0xff] %v1717
        %1780 = vst [vmem:[#allocation4 + $0x8] sm:$0xff] %v1720
        %1781 = vst [vmem:[#allocation4 + $0x10] sm:$0xff] %v1725
        %1782 = vst [vmem:[#allocation4 + $0x18] sm:$0xff] %v1728
        %1783 = vst [vmem:[#allocation4 + $0x20] sm:$0xff] %v1733
        %1784 = vst [vmem:[#allocation4 + $0x28] sm:$0xff] %v1736
        %1785 = vst [vmem:[#allocation4 + $0x30] sm:$0xff] %v1741
        %1786 = vst [vmem:[#allocation4 + $0x38] sm:$0xff] %v1744
        %1787 = vst [vmem:[#allocation4 + $0x40] sm:$0xff] %v1749
        %1788 = vst [vmem:[#allocation4 + $0x48] sm:$0xff] %v1752
        %1789 = vst [vmem:[#allocation4 + $0x50] sm:$0xff] %v1757
        %1790 = vst [vmem:[#allocation4 + $0x58] sm:$0xff] %v1760
        %1791 = vst [vmem:[#allocation4 + $0x60] sm:$0xff] %v1765
        %1792 = vst [vmem:[#allocation4 + $0x68] sm:$0xff] %v1768
        %1793 = vst [vmem:[#allocation4 + $0x70] sm:$0xff] %v1773
        %1794 = vst [vmem:[#allocation4 + $0x78] sm:$0xff] %v1776
        %v1795 = vld [vmem:[#allocation4] sm:$0xff]
        %v1796 = vld [vmem:[#allocation4 + $0x8] sm:$0xff]
        %v1797 = vld [vmem:[%s254] sm:$0xff]
        %v1798 = vld [vmem:[%s254 + $0x8] sm:$0xff]
        %v1799 = vadd.f32 %v1795, %v1797
        %v1800 = vadd.f32 %v1796, %v1798
        %v1801 = vld [vmem:[#allocation3] sm:$0xff]
        %v1802 = vld [vmem:[#allocation3 + $0x8] sm:$0xff]
        %v1803 = vmul.f32 %v1801, 0.3
        %v1804 = vmul.f32 %v1802, 0.3
        %v1805 = vadd.f32 %v1803, %v1799
        %v1806 = vadd.f32 %v1804, %v1800
        %vm1807 = vcmp.ge.f32.partialorder %v1805, 0.5
        %vm1808 = vcmp.ge.f32.partialorder %v1806, 0.5
        %v1809 = vsel %vm1807, 0.0, %v1805
        %v1810 = vsel %vm1808, 0.0, %v1806
        %1811 = vst [vmem:[#allocation3] sm:$0xff] %v1809
        %1812 = vst [vmem:[#allocation3 + $0x8] sm:$0xff] %v1810
        %v1813 = vsel %vm1807, 1, 0
        %v1814 = vsel %vm1808, 1, 0
        %v1815 = vcvt.s32.f32 %v1813
        %v1816 = vcvt.s32.f32 %v1814
        %1817 = vst [vmem:[%s288] sm:$0xff] %v1815
        %1818 = vst [vmem:[%s288 + $0x8] sm:$0xff] %v1816
        %v1819 = vld [vmem:[#allocation4 + $0x10] sm:$0xff]
        %v1820 = vld [vmem:[#allocation4 + $0x18] sm:$0xff]
        %v1821 = vld [vmem:[%s254 + $0x10] sm:$0xff]
        %v1822 = vld [vmem:[%s254 + $0x18] sm:$0xff]
        %v1823 = vadd.f32 %v1819, %v1821
        %v1824 = vadd.f32 %v1820, %v1822
        %v1825 = vld [vmem:[#allocation3] sm:$0xff]
        %v1826 = vld [vmem:[#allocation3 + $0x8] sm:$0xff]
        %v1827 = vmul.f32 %v1825, 0.3
        %v1828 = vmul.f32 %v1826, 0.3
        %v1829 = vadd.f32 %v1827, %v1823
        %v1830 = vadd.f32 %v1828, %v1824
        %vm1831 = vcmp.ge.f32.partialorder %v1829, 0.5
        %vm1832 = vcmp.ge.f32.partialorder %v1830, 0.5
        %v1833 = vsel %vm1831, 0.0, %v1829
        %v1834 = vsel %vm1832, 0.0, %v1830
        %1835 = vst [vmem:[#allocation3] sm:$0xff] %v1833
        %1836 = vst [vmem:[#allocation3 + $0x8] sm:$0xff] %v1834
        %v1837 = vsel %vm1831, 1, 0
        %v1838 = vsel %vm1832, 1, 0
        %v1839 = vcvt.s32.f32 %v1837
        %v1840 = vcvt.s32.f32 %v1838
        %1841 = vst [vmem:[%s288 + $0x10] sm:$0xff] %v1839
        %1842 = vst [vmem:[%s288 + $0x18] sm:$0xff] %v1840
        %v1843 = vld [vmem:[#allocation4 + $0x20] sm:$0xff]
        %v1844 = vld [vmem:[#allocation4 + $0x28] sm:$0xff]
        %v1845 = vld [vmem:[%s254 + $0x20] sm:$0xff]
        %v1846 = vld [vmem:[%s254 + $0x28] sm:$0xff]
        %v1847 = vadd.f32 %v1843, %v1845
        %v1848 = vadd.f32 %v1844, %v1846
        %v1849 = vld [vmem:[#allocation3] sm:$0xff]
        %v1850 = vld [vmem:[#allocation3 + $0x8] sm:$0xff]
        %v1851 = vmul.f32 %v1849, 0.3
        %v1852 = vmul.f32 %v1850, 0.3
        %v1853 = vadd.f32 %v1851, %v1847
        %v1854 = vadd.f32 %v1852, %v1848
        %vm1855 = vcmp.ge.f32.partialorder %v1853, 0.5
        %vm1856 = vcmp.ge.f32.partialorder %v1854, 0.5
        %v1857 = vsel %vm1855, 0.0, %v1853
        %v1858 = vsel %vm1856, 0.0, %v1854
        %1859 = vst [vmem:[#allocation3] sm:$0xff] %v1857
        %1860 = vst [vmem:[#allocation3 + $0x8] sm:$0xff] %v1858
        %v1861 = vsel %vm1855, 1, 0
        %v1862 = vsel %vm1856, 1, 0
        %v1863 = vcvt.s32.f32 %v1861
        %v1864 = vcvt.s32.f32 %v1862
        %1865 = vst [vmem:[%s288 + $0x20] sm:$0xff] %v1863
        %1866 = vst [vmem:[%s288 + $0x28] sm:$0xff] %v1864
        %v1867 = vld [vmem:[#allocation4 + $0x30] sm:$0xff]
        %v1868 = vld [vmem:[#allocation4 + $0x38] sm:$0xff]
        %v1869 = vld [vmem:[%s254 + $0x30] sm:$0xff]
        %v1870 = vld [vmem:[%s254 + $0x38] sm:$0xff]
        %v1871 = vadd.f32 %v1867, %v1869
        %v1872 = vadd.f32 %v1868, %v1870
        %v1873 = vld [vmem:[#allocation3] sm:$0xff]
        %v1874 = vld [vmem:[#allocation3 + $0x8] sm:$0xff]
        %v1875 = vmul.f32 %v1873, 0.3
        %v1876 = vmul.f32 %v1874, 0.3
        %v1877 = vadd.f32 %v1875, %v1871
        %v1878 = vadd.f32 %v1876, %v1872
        %vm1879 = vcmp.ge.f32.partialorder %v1877, 0.5
        %vm1880 = vcmp.ge.f32.partialorder %v1878, 0.5
        %v1881 = vsel %vm1879, 0.0, %v1877
        %v1882 = vsel %vm1880, 0.0, %v1878
        %1883 = vst [vmem:[#allocation3] sm:$0xff] %v1881
        %1884 = vst [vmem:[#allocation3 + $0x8] sm:$0xff] %v1882
        %v1885 = vsel %vm1879, 1, 0
        %v1886 = vsel %vm1880, 1, 0
        %v1887 = vcvt.s32.f32 %v1885
        %v1888 = vcvt.s32.f32 %v1886
        %1889 = vst [vmem:[%s288 + $0x30] sm:$0xff] %v1887
        %1890 = vst [vmem:[%s288 + $0x38] sm:$0xff] %v1888
        %v1891 = vld [vmem:[#allocation4 + $0x40] sm:$0xff]
        %v1892 = vld [vmem:[#allocation4 + $0x48] sm:$0xff]
        %v1893 = vld [vmem:[%s254 + $0x40] sm:$0xff]
        %v1894 = vld [vmem:[%s254 + $0x48] sm:$0xff]
        %v1895 = vadd.f32 %v1891, %v1893
        %v1896 = vadd.f32 %v1892, %v1894
        %v1897 = vld [vmem:[#allocation3] sm:$0xff]
        %v1898 = vld [vmem:[#allocation3 + $0x8] sm:$0xff]
        %v1899 = vmul.f32 %v1897, 0.3
        %v1900 = vmul.f32 %v1898, 0.3
        %v1901 = vadd.f32 %v1899, %v1895
        %v1902 = vadd.f32 %v1900, %v1896
        %vm1903 = vcmp.ge.f32.partialorder %v1901, 0.5
        %vm1904 = vcmp.ge.f32.partialorder %v1902, 0.5
        %v1905 = vsel %vm1903, 0.0, %v1901
        %v1906 = vsel %vm1904, 0.0, %v1902
        %1907 = vst [vmem:[#allocation3] sm:$0xff] %v1905
        %1908 = vst [vmem:[#allocation3 + $0x8] sm:$0xff] %v1906
        %v1909 = vsel %vm1903, 1, 0
        %v1910 = vsel %vm1904, 1, 0
        %v1911 = vcvt.s32.f32 %v1909
        %v1912 = vcvt.s32.f32 %v1910
        %1913 = vst [vmem:[%s288 + $0x40] sm:$0xff] %v1911
        %1914 = vst [vmem:[%s288 + $0x48] sm:$0xff] %v1912
        %v1915 = vld [vmem:[#allocation4 + $0x50] sm:$0xff]
        %v1916 = vld [vmem:[#allocation4 + $0x58] sm:$0xff]
        %v1917 = vld [vmem:[%s254 + $0x50] sm:$0xff]
        %v1918 = vld [vmem:[%s254 + $0x58] sm:$0xff]
        %v1919 = vadd.f32 %v1915, %v1917
        %v1920 = vadd.f32 %v1916, %v1918
        %v1921 = vld [vmem:[#allocation3] sm:$0xff]
        %v1922 = vld [vmem:[#allocation3 + $0x8] sm:$0xff]
        %v1923 = vmul.f32 %v1921, 0.3
        %v1924 = vmul.f32 %v1922, 0.3
        %v1925 = vadd.f32 %v1923, %v1919
        %v1926 = vadd.f32 %v1924, %v1920
        %vm1927 = vcmp.ge.f32.partialorder %v1925, 0.5
        %vm1928 = vcmp.ge.f32.partialorder %v1926, 0.5
        %v1929 = vsel %vm1927, 0.0, %v1925
        %v1930 = vsel %vm1928, 0.0, %v1926
        %1931 = vst [vmem:[#allocation3] sm:$0xff] %v1929
        %1932 = vst [vmem:[#allocation3 + $0x8] sm:$0xff] %v1930
        %v1933 = vsel %vm1927, 1, 0
        %v1934 = vsel %vm1928, 1, 0
        %v1935 = vcvt.s32.f32 %v1933
        %v1936 = vcvt.s32.f32 %v1934
        %1937 = vst [vmem:[%s288 + $0x50] sm:$0xff] %v1935
        %1938 = vst [vmem:[%s288 + $0x58] sm:$0xff] %v1936
        %v1939 = vld [vmem:[#allocation4 + $0x60] sm:$0xff]
        %v1940 = vld [vmem:[#allocation4 + $0x68] sm:$0xff]
        %v1941 = vld [vmem:[%s254 + $0x60] sm:$0xff]
        %v1942 = vld [vmem:[%s254 + $0x68] sm:$0xff]
        %v1943 = vadd.f32 %v1939, %v1941
        %v1944 = vadd.f32 %v1940, %v1942
        %v1945 = vld [vmem:[#allocation3] sm:$0xff]
        %v1946 = vld [vmem:[#allocation3 + $0x8] sm:$0xff]
        %v1947 = vmul.f32 %v1945, 0.3
        %v1948 = vmul.f32 %v1946, 0.3
        %v1949 = vadd.f32 %v1947, %v1943
        %v1950 = vadd.f32 %v1948, %v1944
        %vm1951 = vcmp.ge.f32.partialorder %v1949, 0.5
        %vm1952 = vcmp.ge.f32.partialorder %v1950, 0.5
        %v1953 = vsel %vm1951, 0.0, %v1949
        %v1954 = vsel %vm1952, 0.0, %v1950
        %1955 = vst [vmem:[#allocation3] sm:$0xff] %v1953
        %1956 = vst [vmem:[#allocation3 + $0x8] sm:$0xff] %v1954
        %v1957 = vsel %vm1951, 1, 0
        %v1958 = vsel %vm1952, 1, 0
        %v1959 = vcvt.s32.f32 %v1957
        %v1960 = vcvt.s32.f32 %v1958
        %1961 = vst [vmem:[%s288 + $0x60] sm:$0xff] %v1959
        %1962 = vst [vmem:[%s288 + $0x68] sm:$0xff] %v1960
        %v1963 = vld [vmem:[#allocation4 + $0x70] sm:$0xff]
        %v1964 = vld [vmem:[#allocation4 + $0x78] sm:$0xff]
        %v1965 = vld [vmem:[%s254 + $0x70] sm:$0xff]
        %v1966 = vld [vmem:[%s254 + $0x78] sm:$0xff]
        %v1967 = vadd.f32 %v1963, %v1965
        %v1968 = vadd.f32 %v1964, %v1966
        %v1969 = vld [vmem:[#allocation3] sm:$0xff]
        %v1970 = vld [vmem:[#allocation3 + $0x8] sm:$0xff]
        %v1971 = vmul.f32 %v1969, 0.3
        %v1972 = vmul.f32 %v1970, 0.3
        %v1973 = vadd.f32 %v1971, %v1967
        %v1974 = vadd.f32 %v1972, %v1968
        %vm1975 = vcmp.ge.f32.partialorder %v1973, 0.5
        %vm1976 = vcmp.ge.f32.partialorder %v1974, 0.5
        %v1977 = vsel %vm1975, 0.0, %v1973
        %v1978 = vsel %vm1976, 0.0, %v1974
        %1979 = vst [vmem:[#allocation3] sm:$0xff] %v1977
        %1980 = vst [vmem:[#allocation3 + $0x8] sm:$0xff] %v1978
        %v1981 = vsel %vm1975, 1, 0
        %v1982 = vsel %vm1976, 1, 0
        %v1983 = vcvt.s32.f32 %v1981
        %v1984 = vcvt.s32.f32 %v1982
        %1985 = vst [vmem:[%s288 + $0x70] sm:$0xff] %v1983
        %1986 = vst [vmem:[%s288 + $0x78] sm:$0xff] %v1984
        %s1987 = sand.u32 %s157, 1
        %s1988 = scalar_lea.sflag [#allocation7], %s1987
        %s1989 = sand.u32 %s157, 1
        %s1990 = smul.addr %s1989, 128
        %s1991 = scalar_lea.vmem [#allocation11], %s1990
        // Predicated region
        $region57: #{tpu_custom_call.1} parent=39 // pred_check
          %p1992 = pneg %p167
        $region58: #{tpu_custom_call.1} parent=39 // pred_check_branch
          %1994 = sbr.rel (%p1992) target = $region60
        $region59: #{tpu_custom_call.1} parent=39 // pred_region
          %s1995 = sadd.s32 %s27, %s28
          %s1996 = smul.u32 16, %s1995
          %s1998 = ssub.s32 2048, 2048
          %1999 = vsyncadd %s1988, %s1998
          %s2000 = smul.addr %s1996, 128
          %s2001 = scalar_lea.hbm %s5, %s2000
          %s2002 = sshll.u32 %s1991, 4
          %s2003 = int_to_ptr.vmem [resolvable:$true] %s2002
          %2008 = dma.vmem_to_hbm [thread:$0]  %s2003, 2048, %s2001, %s1988, 128, 128, 8
        $region60: #{tpu_custom_call.1} parent=39 // pred_fallthru
          _
      $region40: #{tpu_custom_call.1} parent=5 // pred_fallthru
        _
      %p2009 = scmp.le.s32.totalorder 2, %s18
      // Predicated region
      $region61: #{tpu_custom_call.1} parent=5 // pred_check
        %p2010 = pneg %p2009
      $region62: #{tpu_custom_call.1} parent=5 // pred_check_branch
        %2012 = sbr.rel (%p2010) target = $region64
      $region63: #{tpu_custom_call.1} parent=5 // pred_region
        %s2013 = ssub.s32 %s18, 2
        // Predicated region
        $region65: #{tpu_custom_call.1} parent=63 // pred_check
          %p2014 = pneg %p173
        $region66: #{tpu_custom_call.1} parent=63 // pred_check_branch
          %2016 = sbr.rel (%p2014) target = $region68
        $region67: #{tpu_custom_call.1} parent=63 // pred_region
          %s2017 = sand.u32 %s158, 1
          %s2018 = scalar_lea.sflag [#allocation7], %s2017
          %s2019 = sand.u32 %s158, 1
          %s2020 = smul.addr %s2019, 128
          %s2021 = scalar_lea.vmem [#allocation11], %s2020
          %2022 = dma.done %s2018, 2048
        $region68: #{tpu_custom_call.1} parent=63 // pred_fallthru
          _
      $region64: #{tpu_custom_call.1} parent=5 // pred_fallthru
        _
    $region6: #{tpu_custom_call.1} parent=1 // loop_footer
      %s22 = sadd.s32 1, %s18
    $region7: #{tpu_custom_call.1} parent=1 // loop_footer_branch
      %17 = sbr.rel target = $region3
    $region8: #{tpu_custom_call.1} parent=1 // loop_exit
      _
    %2023 = vsyncpa [#allocation6], 1
    %s2024 = scalar_lea.sflag [#allocation6], 1
    %2025 = vsyncpa %s2024, 1
    %2026 = vsyncpa [#allocation9], 1
    %2027 = vsyncpa [#allocation7], 1
    %s2028 = scalar_lea.sflag [#allocation7], 1
    %2029 = vsyncpa %s2028, 1

</llo_original>
